<compile_context>
chip_gen: v7x
topology: tpu7x:2x2x1
jax: 0.10.0
libtpu: 0.0.40
codegen_flags: <defaults>
</compile_context>

<pallas_src>
import numpy as np
import jax
import jax.numpy as jnp
from jax import lax
from jax.experimental import pallas as pl
from jax.experimental.pallas import tpu as pltpu


LANE = 128
SUBLANE = 8


def _round_up(x, m):
    return ((x + m - 1) // m) * m


# ----------------------------------------------------------------------------- #
# Fused Pallas kernel: stacked LSTM over the full sequence + packed projection
# ----------------------------------------------------------------------------- #
def make_fused_lstm_kernel(num_layers, seq_len, b_pad, hidden, batch_sizes):
    """Builds the fused kernel.

    Ref order (all full VMEM blocks, no grid):
      inputs : x (S*Bp, E) bf16,
               [w_ih_l (Kin, 4H) bf16, w_hh_l (H, 4H) bf16, b_l (1, 4H) f32] * L,
               w_out (H, Vp) bf16, b_out (1, Vp) f32
      outputs: out (Pp, Vp) f32
      scratch: gx (S*Bp, 4H) f32, hseq (S*Bp, H) f32, packed (Pp, H) f32
    """
    L, S, Bp, H = num_layers, seq_len, b_pad, hidden

    def kernel(*refs):
        x_ref = refs[0]
        w_ih_refs = [refs[1 + 3 * l] for l in range(L)]
        w_hh_refs = [refs[2 + 3 * l] for l in range(L)]
        b_refs = [refs[3 + 3 * l] for l in range(L)]
        wout_ref = refs[1 + 3 * L]
        bout_ref = refs[2 + 3 * L]
        out_ref = refs[3 + 3 * L]
        gx_ref, hseq_ref, packed_ref = refs[4 + 3 * L:]

        layer_in = x_ref[...]                                    # (S*Bp, E) bf16
        for l in range(L):
            # ---- batched input->gate projection for the whole sequence (one big
            #      bf16 MXU matmul, M = S*Bp) + bias, accumulated in f32.
            gx_ref[...] = (jnp.dot(layer_in, w_ih_refs[l][...],
                                   preferred_element_type=jnp.float32)
                           + b_refs[l][...])

            w_hh = w_hh_refs[l][...]                             # hoisted (H, 4H) bf16

            # ---- serial recurrence; h/c carried in vregs, only h @ w_hh per step.
            def step(t, carry, w_hh=w_hh):
                h, c = carry
                row = pl.multiple_of(t * Bp, Bp)
                gates = (gx_ref[pl.ds(row, Bp), :]
                         + jnp.dot(h.astype(jnp.bfloat16), w_hh,
                                   preferred_element_type=jnp.float32))  # (Bp, 4H)
                i_g = jax.nn.sigmoid(gates[:, 0 * H:1 * H])
                f_g = jax.nn.sigmoid(gates[:, 1 * H:2 * H])
                g_g = jnp.tanh(gates[:, 2 * H:3 * H])
                o_g = jax.nn.sigmoid(gates[:, 3 * H:4 * H])
                c_new = f_g * c + i_g * g_g
                h_new = o_g * jnp.tanh(c_new)
                hseq_ref[pl.ds(row, Bp), :] = h_new
                return (h_new, c_new)

            zeros = jnp.zeros((Bp, H), jnp.float32)
            # unroll=True is fine while S is small; switch to partial unroll for long S.
            lax.fori_loop(0, S, step, (zeros, zeros), unroll=True)

            if l + 1 < L:
                layer_in = hseq_ref[...].astype(jnp.bfloat16)    # (S*Bp, H)

        # ---- gather the packed rows (pack_padded_sequence order; indices static
        #      because lens is host-side) and project only those rows.
        packed_ref[...] = jnp.zeros_like(packed_ref)
        off = 0
        for t in range(S):
            n_t = int(batch_sizes[t])
            if n_t > 0:
                packed_ref[off:off + n_t, :] = hseq_ref[t * Bp:t * Bp + n_t, :]
                off += n_t

        out_ref[...] = (jnp.dot(packed_ref[...].astype(jnp.bfloat16), wout_ref[...],
                                preferred_element_type=jnp.float32)
                        + bout_ref[...])

    return kernel


# ----------------------------------------------------------------------------- #
# Wrapper: embedding/concat glue, padding, weight casting, un-padding
# ----------------------------------------------------------------------------- #
def lstm_model_forward(params, input_features, caps, lens):
    """Pallas implementation of LSTMModel.forward.

    input_features: (B, E) float32
    caps:           (B, T) int32 token ids
    lens:           python list of ints, sorted descending, lens[i] <= T+1
    returns:        (sum(lens), V) logits in pack_padded_sequence order.
    """
    B, T = caps.shape
    E = params["embedding"].shape[1]
    H = params["lstm"][0]["w_hh"].shape[0]
    V = params["w_out"].shape[1]
    L = len(params["lstm"])
    S = T + 1

    Bp = _round_up(B, SUBLANE)
    Vp = _round_up(V, LANE)

    lens_np = np.asarray(lens)
    assert int(lens_np.max()) <= S
    batch_sizes = [int((lens_np > t).sum()) for t in range(S)]
    P = int(lens_np.sum())
    Pp = _round_up(P, SUBLANE)

    # --- glue: embedding lookup + features concat, time-major, batch-padded
    emb = jnp.take(params["embedding"], caps, axis=0)                   # (B, T, E)
    x = jnp.concatenate([input_features[:, None, :], emb], axis=1)      # (B, S, E)
    x = jnp.transpose(x, (1, 0, 2)).astype(jnp.float32)                 # (S, B, E)
    x = jnp.pad(x, ((0, 0), (0, Bp - B), (0, 0)))                       # (S, Bp, E)
    x = x.reshape(S * Bp, E).astype(jnp.bfloat16)

    # --- weights: bf16 for the MXU, biases in f32 (PyTorch b_ih + b_hh pre-summed)
    call_args = [x]
    for layer in params["lstm"]:
        call_args += [layer["w_ih"].astype(jnp.bfloat16),                # (Kin, 4H)
                      layer["w_hh"].astype(jnp.bfloat16),                # (H, 4H)
                      layer["b"].astype(jnp.float32)]                    # (1, 4H)
    w_out = jnp.zeros((H, Vp), jnp.float32).at[:, :V].set(
        params["w_out"]).astype(jnp.bfloat16)
    b_out = jnp.zeros((1, Vp), jnp.float32).at[:, :V].set(params["b_out"])
    call_args += [w_out, b_out]

    scratch = [pltpu.VMEM((S * Bp, 4 * H), jnp.float32),   # gx: batched gate pre-acts
               pltpu.VMEM((S * Bp, H), jnp.float32),       # layer output over time
               pltpu.VMEM((Pp, H), jnp.float32)]           # packed hidden rows

    out_pad = pl.pallas_call(
        make_fused_lstm_kernel(L, S, Bp, H, batch_sizes),
        out_shape=jax.ShapeDtypeStruct((Pp, Vp), jnp.float32),
        scratch_shapes=scratch,
    )(*call_args)                                          # (Pp, Vp)

    return out_pad[:P, :V]                                 # (sum(lens), V)


# ----------------------------------------------------------------------------- #
# Pure-JAX reference (f32; for correctness check)
# ----------------------------------------------------------------------------- #
def reference_forward(params, input_features, caps, lens):
    emb = jnp.take(params["embedding"], caps, axis=0)
    x = jnp.concatenate([input_features[:, None, :], emb], axis=1)  # (B, S, E)
    B, S, _ = x.shape
    h_seq = jnp.transpose(x, (1, 0, 2))
    for layer in params["lstm"]:
        H = layer["w_hh"].shape[0]

        def step(carry, x_t):
            h, c = carry
            g = x_t @ layer["w_ih"] + h @ layer["w_hh"] + layer["b"][0]
            i = jax.nn.sigmoid(g[:, 0 * H:1 * H])
            f = jax.nn.sigmoid(g[:, 1 * H:2 * H])
            gg = jnp.tanh(g[:, 2 * H:3 * H])
            o = jax.nn.sigmoid(g[:, 3 * H:4 * H])
            c = f * c + i * gg
            h = o * jnp.tanh(c)
            return (h, c), h

        init = (jnp.zeros((B, H), jnp.float32), jnp.zeros((B, H), jnp.float32))
        _, h_seq = jax.lax.scan(step, init, h_seq)
    lens_np = np.asarray(lens)
    rows = []
    for t in range(int(lens_np.max())):
        for b in range(B):
            if lens_np[b] > t:
                rows.append(h_seq[t, b])
    packed_h = jnp.stack(rows)
    return packed_h @ params["w_out"] + params["b_out"][0]


# ----------------------------------------------------------------------------- #
# Main
# ----------------------------------------------------------------------------- #
if __name__ == "__main__":
    # Hyper-parameters (small, consistent with the module's __init__)
    EMB = 32          # embedding_size
    HID = 32          # hidden_layer_size  (4*HID = 128 -> lane-aligned gate block)
    VOCAB = 64        # vocabulary_size
    NUM_LAYERS = 2
    B = 2             # batch
    T = 8             # caption length  -> sequence length S = T + 1 = 9

    key = jax.random.PRNGKey(0)
    keys = jax.random.split(key, 16)

    # Deterministic synthetic parameters
    params = {
        "embedding": jax.random.normal(keys[0], (VOCAB, EMB), jnp.float32) * 0.1,
        "w_out": jax.random.normal(keys[1], (HID, VOCAB), jnp.float32) * 0.1,
        "b_out": jax.random.normal(keys[2], (1, VOCAB), jnp.float32) * 0.1,
        "lstm": [],
    }
    for layer_idx in range(NUM_LAYERS):
        e_in = EMB if layer_idx == 0 else HID
        k = jax.random.split(keys[3 + layer_idx], 3)
        params["lstm"].append({
            # stored pre-transposed: (in, 4H) and (H, 4H); PyTorch gate order i,f,g,o
            "w_ih": jax.random.normal(k[0], (e_in, 4 * HID), jnp.float32) * 0.1,
            "w_hh": jax.random.normal(k[1], (HID, 4 * HID), jnp.float32) * 0.1,
            "b": jax.random.normal(k[2], (1, 4 * HID), jnp.float32) * 0.1,  # b_ih + b_hh
        })

    # Example inputs
    input_features = jax.random.normal(keys[8], (B, EMB), jnp.float32)   # (B, E)
    caps = jax.random.randint(keys[9], (B, T), 0, VOCAB, dtype=jnp.int32)
    lens = [9, 7]  # sorted descending, as pack_padded_sequence (enforce_sorted) requires

    out = lstm_model_forward(params, input_features, caps, lens)
    out = jax.block_until_ready(out)

    ref = reference_forward(params, input_features, caps, lens)
    # bf16 MXU weights vs. f32 reference -> slightly looser tolerance
    np.testing.assert_allclose(np.asarray(out), np.asarray(ref), atol=2e-2, rtol=2e-2)

    assert out.shape == (sum(lens), VOCAB)
    print("KERNEL_OK")
</pallas_src>

<mosaic_0001>
module attributes {stable_mosaic.version = 11 : i64} {
  func.func @kernel(%arg0: memref<72x32xbf16, #tpu.memory_space<vmem>>, %arg1: memref<32x128xbf16, #tpu.memory_space<vmem>>, %arg2: memref<32x128xbf16, #tpu.memory_space<vmem>>, %arg3: memref<1x128xf32, #tpu.memory_space<vmem>>, %arg4: memref<32x128xbf16, #tpu.memory_space<vmem>>, %arg5: memref<32x128xbf16, #tpu.memory_space<vmem>>, %arg6: memref<1x128xf32, #tpu.memory_space<vmem>>, %arg7: memref<32x128xbf16, #tpu.memory_space<vmem>>, %arg8: memref<1x128xf32, #tpu.memory_space<vmem>>, %arg9: memref<16x128xf32, #tpu.memory_space<vmem>>, %arg10: memref<72x128xf32, #tpu.memory_space<vmem>>, %arg11: memref<72x32xf32, #tpu.memory_space<vmem>>, %arg12: memref<16x32xf32, #tpu.memory_space<vmem>>) attributes {dimension_semantics = [], scalar_prefetch = 0 : i64, scratch_operands = 3 : i64, tpu.core_type = #tpu.core_type<tc>} {
    %c0 = arith.constant 0 : index
    %c0_0 = arith.constant 0 : index
    %0 = vector.load %arg0[%c0, %c0_0] : memref<72x32xbf16, #tpu.memory_space<vmem>>, vector<72x32xbf16>
    %c0_1 = arith.constant 0 : index
    %c0_2 = arith.constant 0 : index
    %1 = vector.load %arg1[%c0_1, %c0_2] : memref<32x128xbf16, #tpu.memory_space<vmem>>, vector<32x128xbf16>
    %cst = arith.constant dense<0.000000e+00> : vector<72x128xf32>
    %2 = tpu.matmul %0, %1, %cst {dimension_numbers = #tpu.dot_dimension_numbers<[1], [0], [0], [1], [0, 0, 1, 1], [], []>} : vector<72x32xbf16>, vector<32x128xbf16>, vector<72x128xf32> -> vector<72x128xf32>
    %c0_3 = arith.constant 0 : index
    %c0_4 = arith.constant 0 : index
    %3 = vector.load %arg3[%c0_3, %c0_4] : memref<1x128xf32, #tpu.memory_space<vmem>>, vector<1x128xf32>
    %4 = vector.broadcast %3 : vector<1x128xf32> to vector<72x128xf32>
    %5 = arith.addf %2, %4 : vector<72x128xf32>
    %c0_5 = arith.constant 0 : index
    %c0_6 = arith.constant 0 : index
    %6 = vector.load %arg10[%c0_5, %c0_6] : memref<72x128xf32, #tpu.memory_space<vmem>>, vector<72x128xf32>
    tpu.vector_store %arg10[%c0_5, %c0_6], %5 {strides = array<i32>} : memref<72x128xf32, #tpu.memory_space<vmem>>, vector<72x128xf32>,
    %c0_7 = arith.constant 0 : index
    %c0_8 = arith.constant 0 : index
    %7 = vector.load %arg2[%c0_7, %c0_8] : memref<32x128xbf16, #tpu.memory_space<vmem>>, vector<32x128xbf16>
    %cst_9 = arith.constant 0.000000e+00 : f32
    %8 = vector.broadcast %cst_9 : f32 to vector<8x32xf32>
    %c0_i32 = arith.constant 0 : i32
    %c8_i32 = arith.constant 8 : i32
    %9 = arith.muli %c0_i32, %c8_i32 : i32
    %10 = tpu.assume_multiple %9, 8 : i32
    %11 = arith.index_cast %10 : i32 to index
    %c0_10 = arith.constant 0 : index
    %12 = vector.load %arg10[%11, %c0_10] : memref<72x128xf32, #tpu.memory_space<vmem>>, vector<8x128xf32>
    %13 = arith.truncf %8 : vector<8x32xf32> to vector<8x32xbf16>
    %cst_11 = arith.constant dense<0.000000e+00> : vector<8x128xf32>
    %14 = tpu.matmul %13, %7, %cst_11 {dimension_numbers = #tpu.dot_dimension_numbers<[1], [0], [0], [1], [0, 0, 1, 1], [], []>} : vector<8x32xbf16>, vector<32x128xbf16>, vector<8x128xf32> -> vector<8x128xf32>
    %15 = arith.addf %12, %14 : vector<8x128xf32>
    %16 = vector.extract_strided_slice %15 {offsets = [0, 0], sizes = [8, 32], strides = [1, 1]} : vector<8x128xf32> to vector<8x32xf32>
    %17 = arith.negf %16 : vector<8x32xf32>
    %18 = math.exp %17 : vector<8x32xf32>
    %cst_12 = arith.constant 1.000000e+00 : f32
    %19 = vector.broadcast %cst_12 : f32 to vector<8x32xf32>
    %20 = arith.addf %19, %18 : vector<8x32xf32>
    %21 = arith.divf %19, %20 : vector<8x32xf32>
    %22 = vector.extract_strided_slice %15 {offsets = [0, 32], sizes = [8, 32], strides = [1, 1]} : vector<8x128xf32> to vector<8x32xf32>
    %23 = arith.negf %22 : vector<8x32xf32>
    %24 = math.exp %23 : vector<8x32xf32>
    %cst_13 = arith.constant 1.000000e+00 : f32
    %25 = vector.broadcast %cst_13 : f32 to vector<8x32xf32>
    %26 = arith.addf %25, %24 : vector<8x32xf32>
    %27 = arith.divf %25, %26 : vector<8x32xf32>
    %28 = vector.extract_strided_slice %15 {offsets = [0, 64], sizes = [8, 32], strides = [1, 1]} : vector<8x128xf32> to vector<8x32xf32>
    %29 = math.tanh %28 : vector<8x32xf32>
    %30 = vector.extract_strided_slice %15 {offsets = [0, 96], sizes = [8, 32], strides = [1, 1]} : vector<8x128xf32> to vector<8x32xf32>
    %31 = arith.negf %30 : vector<8x32xf32>
    %32 = math.exp %31 : vector<8x32xf32>
    %cst_14 = arith.constant 1.000000e+00 : f32
    %33 = vector.broadcast %cst_14 : f32 to vector<8x32xf32>
    %34 = arith.addf %33, %32 : vector<8x32xf32>
    %35 = arith.divf %33, %34 : vector<8x32xf32>
    %36 = arith.mulf %27, %8 : vector<8x32xf32>
    %37 = arith.mulf %21, %29 : vector<8x32xf32>
    %38 = arith.addf %36, %37 : vector<8x32xf32>
    %39 = math.tanh %38 : vector<8x32xf32>
    %40 = arith.mulf %35, %39 : vector<8x32xf32>
    %41 = arith.index_cast %10 : i32 to index
    %c0_15 = arith.constant 0 : index
    %42 = vector.load %arg11[%41, %c0_15] : memref<72x32xf32, #tpu.memory_space<vmem>>, vector<8x32xf32>
    tpu.vector_store %arg11[%41, %c0_15], %40 {strides = array<i32>} : memref<72x32xf32, #tpu.memory_space<vmem>>, vector<8x32xf32>,
    %c1_i32 = arith.constant 1 : i32
    %c8_i32_16 = arith.constant 8 : i32
    %43 = arith.muli %c1_i32, %c8_i32_16 : i32
    %44 = tpu.assume_multiple %43, 8 : i32
    %45 = arith.index_cast %44 : i32 to index
    %c0_17 = arith.constant 0 : index
    %46 = vector.load %arg10[%45, %c0_17] : memref<72x128xf32, #tpu.memory_space<vmem>>, vector<8x128xf32>
    %47 = arith.truncf %40 : vector<8x32xf32> to vector<8x32xbf16>
    %cst_18 = arith.constant dense<0.000000e+00> : vector<8x128xf32>
    %48 = tpu.matmul %47, %7, %cst_18 {dimension_numbers = #tpu.dot_dimension_numbers<[1], [0], [0], [1], [0, 0, 1, 1], [], []>} : vector<8x32xbf16>, vector<32x128xbf16>, vector<8x128xf32> -> vector<8x128xf32>
    %49 = arith.addf %46, %48 : vector<8x128xf32>
    %50 = vector.extract_strided_slice %49 {offsets = [0, 0], sizes = [8, 32], strides = [1, 1]} : vector<8x128xf32> to vector<8x32xf32>
    %51 = arith.negf %50 : vector<8x32xf32>
    %52 = math.exp %51 : vector<8x32xf32>
    %cst_19 = arith.constant 1.000000e+00 : f32
    %53 = vector.broadcast %cst_19 : f32 to vector<8x32xf32>
    %54 = arith.addf %53, %52 : vector<8x32xf32>
    %55 = arith.divf %53, %54 : vector<8x32xf32>
    %56 = vector.extract_strided_slice %49 {offsets = [0, 32], sizes = [8, 32], strides = [1, 1]} : vector<8x128xf32> to vector<8x32xf32>
    %57 = arith.negf %56 : vector<8x32xf32>
    %58 = math.exp %57 : vector<8x32xf32>
    %cst_20 = arith.constant 1.000000e+00 : f32
    %59 = vector.broadcast %cst_20 : f32 to vector<8x32xf32>
    %60 = arith.addf %59, %58 : vector<8x32xf32>
    %61 = arith.divf %59, %60 : vector<8x32xf32>
    %62 = vector.extract_strided_slice %49 {offsets = [0, 64], sizes = [8, 32], strides = [1, 1]} : vector<8x128xf32> to vector<8x32xf32>
    %63 = math.tanh %62 : vector<8x32xf32>
    %64 = vector.extract_strided_slice %49 {offsets = [0, 96], sizes = [8, 32], strides = [1, 1]} : vector<8x128xf32> to vector<8x32xf32>
    %65 = arith.negf %64 : vector<8x32xf32>
    %66 = math.exp %65 : vector<8x32xf32>
    %cst_21 = arith.constant 1.000000e+00 : f32
    %67 = vector.broadcast %cst_21 : f32 to vector<8x32xf32>
    %68 = arith.addf %67, %66 : vector<8x32xf32>
    %69 = arith.divf %67, %68 : vector<8x32xf32>
    %70 = arith.mulf %61, %38 : vector<8x32xf32>
    %71 = arith.mulf %55, %63 : vector<8x32xf32>
    %72 = arith.addf %70, %71 : vector<8x32xf32>
    %73 = math.tanh %72 : vector<8x32xf32>
    %74 = arith.mulf %69, %73 : vector<8x32xf32>
    %75 = arith.index_cast %44 : i32 to index
    %c0_22 = arith.constant 0 : index
    %76 = vector.load %arg11[%75, %c0_22] : memref<72x32xf32, #tpu.memory_space<vmem>>, vector<8x32xf32>
    tpu.vector_store %arg11[%75, %c0_22], %74 {strides = array<i32>} : memref<72x32xf32, #tpu.memory_space<vmem>>, vector<8x32xf32>,
    %c2_i32 = arith.constant 2 : i32
    %c8_i32_23 = arith.constant 8 : i32
    %77 = arith.muli %c2_i32, %c8_i32_23 : i32
    %78 = tpu.assume_multiple %77, 8 : i32
    %79 = arith.index_cast %78 : i32 to index
    %c0_24 = arith.constant 0 : index
    %80 = vector.load %arg10[%79, %c0_24] : memref<72x128xf32, #tpu.memory_space<vmem>>, vector<8x128xf32>
    %81 = arith.truncf %74 : vector<8x32xf32> to vector<8x32xbf16>
    %cst_25 = arith.constant dense<0.000000e+00> : vector<8x128xf32>
    %82 = tpu.matmul %81, %7, %cst_25 {dimension_numbers = #tpu.dot_dimension_numbers<[1], [0], [0], [1], [0, 0, 1, 1], [], []>} : vector<8x32xbf16>, vector<32x128xbf16>, vector<8x128xf32> -> vector<8x128xf32>
    %83 = arith.addf %80, %82 : vector<8x128xf32>
    %84 = vector.extract_strided_slice %83 {offsets = [0, 0], sizes = [8, 32], strides = [1, 1]} : vector<8x128xf32> to vector<8x32xf32>
    %85 = arith.negf %84 : vector<8x32xf32>
    %86 = math.exp %85 : vector<8x32xf32>
    %cst_26 = arith.constant 1.000000e+00 : f32
    %87 = vector.broadcast %cst_26 : f32 to vector<8x32xf32>
    %88 = arith.addf %87, %86 : vector<8x32xf32>
    %89 = arith.divf %87, %88 : vector<8x32xf32>
    %90 = vector.extract_strided_slice %83 {offsets = [0, 32], sizes = [8, 32], strides = [1, 1]} : vector<8x128xf32> to vector<8x32xf32>
    %91 = arith.negf %90 : vector<8x32xf32>
    %92 = math.exp %91 : vector<8x32xf32>
    %cst_27 = arith.constant 1.000000e+00 : f32
    %93 = vector.broadcast %cst_27 : f32 to vector<8x32xf32>
    %94 = arith.addf %93, %92 : vector<8x32xf32>
    %95 = arith.divf %93, %94 : vector<8x32xf32>
    %96 = vector.extract_strided_slice %83 {offsets = [0, 64], sizes = [8, 32], strides = [1, 1]} : vector<8x128xf32> to vector<8x32xf32>
    %97 = math.tanh %96 : vector<8x32xf32>
    %98 = vector.extract_strided_slice %83 {offsets = [0, 96], sizes = [8, 32], strides = [1, 1]} : vector<8x128xf32> to vector<8x32xf32>
    %99 = arith.negf %98 : vector<8x32xf32>
    %100 = math.exp %99 : vector<8x32xf32>
    %cst_28 = arith.constant 1.000000e+00 : f32
    %101 = vector.broadcast %cst_28 : f32 to vector<8x32xf32>
    %102 = arith.addf %101, %100 : vector<8x32xf32>
    %103 = arith.divf %101, %102 : vector<8x32xf32>
    %104 = arith.mulf %95, %72 : vector<8x32xf32>
    %105 = arith.mulf %89, %97 : vector<8x32xf32>
    %106 = arith.addf %104, %105 : vector<8x32xf32>
    %107 = math.tanh %106 : vector<8x32xf32>
    %108 = arith.mulf %103, %107 : vector<8x32xf32>
    %109 = arith.index_cast %78 : i32 to index
    %c0_29 = arith.constant 0 : index
    %110 = vector.load %arg11[%109, %c0_29] : memref<72x32xf32, #tpu.memory_space<vmem>>, vector<8x32xf32>
    tpu.vector_store %arg11[%109, %c0_29], %108 {strides = array<i32>} : memref<72x32xf32, #tpu.memory_space<vmem>>, vector<8x32xf32>,
    %c3_i32 = arith.constant 3 : i32
    %c8_i32_30 = arith.constant 8 : i32
    %111 = arith.muli %c3_i32, %c8_i32_30 : i32
    %112 = tpu.assume_multiple %111, 8 : i32
    %113 = arith.index_cast %112 : i32 to index
    %c0_31 = arith.constant 0 : index
    %114 = vector.load %arg10[%113, %c0_31] : memref<72x128xf32, #tpu.memory_space<vmem>>, vector<8x128xf32>
    %115 = arith.truncf %108 : vector<8x32xf32> to vector<8x32xbf16>
    %cst_32 = arith.constant dense<0.000000e+00> : vector<8x128xf32>
    %116 = tpu.matmul %115, %7, %cst_32 {dimension_numbers = #tpu.dot_dimension_numbers<[1], [0], [0], [1], [0, 0, 1, 1], [], []>} : vector<8x32xbf16>, vector<32x128xbf16>, vector<8x128xf32> -> vector<8x128xf32>
    %117 = arith.addf %114, %116 : vector<8x128xf32>
    %118 = vector.extract_strided_slice %117 {offsets = [0, 0], sizes = [8, 32], strides = [1, 1]} : vector<8x128xf32> to vector<8x32xf32>
    %119 = arith.negf %118 : vector<8x32xf32>
    %120 = math.exp %119 : vector<8x32xf32>
    %cst_33 = arith.constant 1.000000e+00 : f32
    %121 = vector.broadcast %cst_33 : f32 to vector<8x32xf32>
    %122 = arith.addf %121, %120 : vector<8x32xf32>
    %123 = arith.divf %121, %122 : vector<8x32xf32>
    %124 = vector.extract_strided_slice %117 {offsets = [0, 32], sizes = [8, 32], strides = [1, 1]} : vector<8x128xf32> to vector<8x32xf32>
    %125 = arith.negf %124 : vector<8x32xf32>
    %126 = math.exp %125 : vector<8x32xf32>
    %cst_34 = arith.constant 1.000000e+00 : f32
    %127 = vector.broadcast %cst_34 : f32 to vector<8x32xf32>
    %128 = arith.addf %127, %126 : vector<8x32xf32>
    %129 = arith.divf %127, %128 : vector<8x32xf32>
    %130 = vector.extract_strided_slice %117 {offsets = [0, 64], sizes = [8, 32], strides = [1, 1]} : vector<8x128xf32> to vector<8x32xf32>
    %131 = math.tanh %130 : vector<8x32xf32>
    %132 = vector.extract_strided_slice %117 {offsets = [0, 96], sizes = [8, 32], strides = [1, 1]} : vector<8x128xf32> to vector<8x32xf32>
    %133 = arith.negf %132 : vector<8x32xf32>
    %134 = math.exp %133 : vector<8x32xf32>
    %cst_35 = arith.constant 1.000000e+00 : f32
    %135 = vector.broadcast %cst_35 : f32 to vector<8x32xf32>
    %136 = arith.addf %135, %134 : vector<8x32xf32>
    %137 = arith.divf %135, %136 : vector<8x32xf32>
    %138 = arith.mulf %129, %106 : vector<8x32xf32>
    %139 = arith.mulf %123, %131 : vector<8x32xf32>
    %140 = arith.addf %138, %139 : vector<8x32xf32>
    %141 = math.tanh %140 : vector<8x32xf32>
    %142 = arith.mulf %137, %141 : vector<8x32xf32>
    %143 = arith.index_cast %112 : i32 to index
    %c0_36 = arith.constant 0 : index
    %144 = vector.load %arg11[%143, %c0_36] : memref<72x32xf32, #tpu.memory_space<vmem>>, vector<8x32xf32>
    tpu.vector_store %arg11[%143, %c0_36], %142 {strides = array<i32>} : memref<72x32xf32, #tpu.memory_space<vmem>>, vector<8x32xf32>,
    %c4_i32 = arith.constant 4 : i32
    %c8_i32_37 = arith.constant 8 : i32
    %145 = arith.muli %c4_i32, %c8_i32_37 : i32
    %146 = tpu.assume_multiple %145, 8 : i32
    %147 = arith.index_cast %146 : i32 to index
    %c0_38 = arith.constant 0 : index
    %148 = vector.load %arg10[%147, %c0_38] : memref<72x128xf32, #tpu.memory_space<vmem>>, vector<8x128xf32>
    %149 = arith.truncf %142 : vector<8x32xf32> to vector<8x32xbf16>
    %cst_39 = arith.constant dense<0.000000e+00> : vector<8x128xf32>
    %150 = tpu.matmul %149, %7, %cst_39 {dimension_numbers = #tpu.dot_dimension_numbers<[1], [0], [0], [1], [0, 0, 1, 1], [], []>} : vector<8x32xbf16>, vector<32x128xbf16>, vector<8x128xf32> -> vector<8x128xf32>
    %151 = arith.addf %148, %150 : vector<8x128xf32>
    %152 = vector.extract_strided_slice %151 {offsets = [0, 0], sizes = [8, 32], strides = [1, 1]} : vector<8x128xf32> to vector<8x32xf32>
    %153 = arith.negf %152 : vector<8x32xf32>
    %154 = math.exp %153 : vector<8x32xf32>
    %cst_40 = arith.constant 1.000000e+00 : f32
    %155 = vector.broadcast %cst_40 : f32 to vector<8x32xf32>
    %156 = arith.addf %155, %154 : vector<8x32xf32>
    %157 = arith.divf %155, %156 : vector<8x32xf32>
    %158 = vector.extract_strided_slice %151 {offsets = [0, 32], sizes = [8, 32], strides = [1, 1]} : vector<8x128xf32> to vector<8x32xf32>
    %159 = arith.negf %158 : vector<8x32xf32>
    %160 = math.exp %159 : vector<8x32xf32>
    %cst_41 = arith.constant 1.000000e+00 : f32
    %161 = vector.broadcast %cst_41 : f32 to vector<8x32xf32>
    %162 = arith.addf %161, %160 : vector<8x32xf32>
    %163 = arith.divf %161, %162 : vector<8x32xf32>
    %164 = vector.extract_strided_slice %151 {offsets = [0, 64], sizes = [8, 32], strides = [1, 1]} : vector<8x128xf32> to vector<8x32xf32>
    %165 = math.tanh %164 : vector<8x32xf32>
    %166 = vector.extract_strided_slice %151 {offsets = [0, 96], sizes = [8, 32], strides = [1, 1]} : vector<8x128xf32> to vector<8x32xf32>
    %167 = arith.negf %166 : vector<8x32xf32>
    %168 = math.exp %167 : vector<8x32xf32>
    %cst_42 = arith.constant 1.000000e+00 : f32
    %169 = vector.broadcast %cst_42 : f32 to vector<8x32xf32>
    %170 = arith.addf %169, %168 : vector<8x32xf32>
    %171 = arith.divf %169, %170 : vector<8x32xf32>
    %172 = arith.mulf %163, %140 : vector<8x32xf32>
    %173 = arith.mulf %157, %165 : vector<8x32xf32>
    %174 = arith.addf %172, %173 : vector<8x32xf32>
    %175 = math.tanh %174 : vector<8x32xf32>
    %176 = arith.mulf %171, %175 : vector<8x32xf32>
    %177 = arith.index_cast %146 : i32 to index
    %c0_43 = arith.constant 0 : index
    %178 = vector.load %arg11[%177, %c0_43] : memref<72x32xf32, #tpu.memory_space<vmem>>, vector<8x32xf32>
    tpu.vector_store %arg11[%177, %c0_43], %176 {strides = array<i32>} : memref<72x32xf32, #tpu.memory_space<vmem>>, vector<8x32xf32>,
    %c5_i32 = arith.constant 5 : i32
    %c8_i32_44 = arith.constant 8 : i32
    %179 = arith.muli %c5_i32, %c8_i32_44 : i32
    %180 = tpu.assume_multiple %179, 8 : i32
    %181 = arith.index_cast %180 : i32 to index
    %c0_45 = arith.constant 0 : index
    %182 = vector.load %arg10[%181, %c0_45] : memref<72x128xf32, #tpu.memory_space<vmem>>, vector<8x128xf32>
    %183 = arith.truncf %176 : vector<8x32xf32> to vector<8x32xbf16>
    %cst_46 = arith.constant dense<0.000000e+00> : vector<8x128xf32>
    %184 = tpu.matmul %183, %7, %cst_46 {dimension_numbers = #tpu.dot_dimension_numbers<[1], [0], [0], [1], [0, 0, 1, 1], [], []>} : vector<8x32xbf16>, vector<32x128xbf16>, vector<8x128xf32> -> vector<8x128xf32>
    %185 = arith.addf %182, %184 : vector<8x128xf32>
    %186 = vector.extract_strided_slice %185 {offsets = [0, 0], sizes = [8, 32], strides = [1, 1]} : vector<8x128xf32> to vector<8x32xf32>
    %187 = arith.negf %186 : vector<8x32xf32>
    %188 = math.exp %187 : vector<8x32xf32>
    %cst_47 = arith.constant 1.000000e+00 : f32
    %189 = vector.broadcast %cst_47 : f32 to vector<8x32xf32>
    %190 = arith.addf %189, %188 : vector<8x32xf32>
    %191 = arith.divf %189, %190 : vector<8x32xf32>
    %192 = vector.extract_strided_slice %185 {offsets = [0, 32], sizes = [8, 32], strides = [1, 1]} : vector<8x128xf32> to vector<8x32xf32>
    %193 = arith.negf %192 : vector<8x32xf32>
    %194 = math.exp %193 : vector<8x32xf32>
    %cst_48 = arith.constant 1.000000e+00 : f32
    %195 = vector.broadcast %cst_48 : f32 to vector<8x32xf32>
    %196 = arith.addf %195, %194 : vector<8x32xf32>
    %197 = arith.divf %195, %196 : vector<8x32xf32>
    %198 = vector.extract_strided_slice %185 {offsets = [0, 64], sizes = [8, 32], strides = [1, 1]} : vector<8x128xf32> to vector<8x32xf32>
    %199 = math.tanh %198 : vector<8x32xf32>
    %200 = vector.extract_strided_slice %185 {offsets = [0, 96], sizes = [8, 32], strides = [1, 1]} : vector<8x128xf32> to vector<8x32xf32>
    %201 = arith.negf %200 : vector<8x32xf32>
    %202 = math.exp %201 : vector<8x32xf32>
    %cst_49 = arith.constant 1.000000e+00 : f32
    %203 = vector.broadcast %cst_49 : f32 to vector<8x32xf32>
    %204 = arith.addf %203, %202 : vector<8x32xf32>
    %205 = arith.divf %203, %204 : vector<8x32xf32>
    %206 = arith.mulf %197, %174 : vector<8x32xf32>
    %207 = arith.mulf %191, %199 : vector<8x32xf32>
    %208 = arith.addf %206, %207 : vector<8x32xf32>
    %209 = math.tanh %208 : vector<8x32xf32>
    %210 = arith.mulf %205, %209 : vector<8x32xf32>
    %211 = arith.index_cast %180 : i32 to index
    %c0_50 = arith.constant 0 : index
    %212 = vector.load %arg11[%211, %c0_50] : memref<72x32xf32, #tpu.memory_space<vmem>>, vector<8x32xf32>
    tpu.vector_store %arg11[%211, %c0_50], %210 {strides = array<i32>} : memref<72x32xf32, #tpu.memory_space<vmem>>, vector<8x32xf32>,
    %c6_i32 = arith.constant 6 : i32
    %c8_i32_51 = arith.constant 8 : i32
    %213 = arith.muli %c6_i32, %c8_i32_51 : i32
    %214 = tpu.assume_multiple %213, 8 : i32
    %215 = arith.index_cast %214 : i32 to index
    %c0_52 = arith.constant 0 : index
    %216 = vector.load %arg10[%215, %c0_52] : memref<72x128xf32, #tpu.memory_space<vmem>>, vector<8x128xf32>
    %217 = arith.truncf %210 : vector<8x32xf32> to vector<8x32xbf16>
    %cst_53 = arith.constant dense<0.000000e+00> : vector<8x128xf32>
    %218 = tpu.matmul %217, %7, %cst_53 {dimension_numbers = #tpu.dot_dimension_numbers<[1], [0], [0], [1], [0, 0, 1, 1], [], []>} : vector<8x32xbf16>, vector<32x128xbf16>, vector<8x128xf32> -> vector<8x128xf32>
    %219 = arith.addf %216, %218 : vector<8x128xf32>
    %220 = vector.extract_strided_slice %219 {offsets = [0, 0], sizes = [8, 32], strides = [1, 1]} : vector<8x128xf32> to vector<8x32xf32>
    %221 = arith.negf %220 : vector<8x32xf32>
    %222 = math.exp %221 : vector<8x32xf32>
    %cst_54 = arith.constant 1.000000e+00 : f32
    %223 = vector.broadcast %cst_54 : f32 to vector<8x32xf32>
    %224 = arith.addf %223, %222 : vector<8x32xf32>
    %225 = arith.divf %223, %224 : vector<8x32xf32>
    %226 = vector.extract_strided_slice %219 {offsets = [0, 32], sizes = [8, 32], strides = [1, 1]} : vector<8x128xf32> to vector<8x32xf32>
    %227 = arith.negf %226 : vector<8x32xf32>
    %228 = math.exp %227 : vector<8x32xf32>
    %cst_55 = arith.constant 1.000000e+00 : f32
    %229 = vector.broadcast %cst_55 : f32 to vector<8x32xf32>
    %230 = arith.addf %229, %228 : vector<8x32xf32>
    %231 = arith.divf %229, %230 : vector<8x32xf32>
    %232 = vector.extract_strided_slice %219 {offsets = [0, 64], sizes = [8, 32], strides = [1, 1]} : vector<8x128xf32> to vector<8x32xf32>
    %233 = math.tanh %232 : vector<8x32xf32>
    %234 = vector.extract_strided_slice %219 {offsets = [0, 96], sizes = [8, 32], strides = [1, 1]} : vector<8x128xf32> to vector<8x32xf32>
    %235 = arith.negf %234 : vector<8x32xf32>
    %236 = math.exp %235 : vector<8x32xf32>
    %cst_56 = arith.constant 1.000000e+00 : f32
    %237 = vector.broadcast %cst_56 : f32 to vector<8x32xf32>
    %238 = arith.addf %237, %236 : vector<8x32xf32>
    %239 = arith.divf %237, %238 : vector<8x32xf32>
    %240 = arith.mulf %231, %208 : vector<8x32xf32>
    %241 = arith.mulf %225, %233 : vector<8x32xf32>
    %242 = arith.addf %240, %241 : vector<8x32xf32>
    %243 = math.tanh %242 : vector<8x32xf32>
    %244 = arith.mulf %239, %243 : vector<8x32xf32>
    %245 = arith.index_cast %214 : i32 to index
    %c0_57 = arith.constant 0 : index
    %246 = vector.load %arg11[%245, %c0_57] : memref<72x32xf32, #tpu.memory_space<vmem>>, vector<8x32xf32>
    tpu.vector_store %arg11[%245, %c0_57], %244 {strides = array<i32>} : memref<72x32xf32, #tpu.memory_space<vmem>>, vector<8x32xf32>,
    %c7_i32 = arith.constant 7 : i32
    %c8_i32_58 = arith.constant 8 : i32
    %247 = arith.muli %c7_i32, %c8_i32_58 : i32
    %248 = tpu.assume_multiple %247, 8 : i32
    %249 = arith.index_cast %248 : i32 to index
    %c0_59 = arith.constant 0 : index
    %250 = vector.load %arg10[%249, %c0_59] : memref<72x128xf32, #tpu.memory_space<vmem>>, vector<8x128xf32>
    %251 = arith.truncf %244 : vector<8x32xf32> to vector<8x32xbf16>
    %cst_60 = arith.constant dense<0.000000e+00> : vector<8x128xf32>
    %252 = tpu.matmul %251, %7, %cst_60 {dimension_numbers = #tpu.dot_dimension_numbers<[1], [0], [0], [1], [0, 0, 1, 1], [], []>} : vector<8x32xbf16>, vector<32x128xbf16>, vector<8x128xf32> -> vector<8x128xf32>
    %253 = arith.addf %250, %252 : vector<8x128xf32>
    %254 = vector.extract_strided_slice %253 {offsets = [0, 0], sizes = [8, 32], strides = [1, 1]} : vector<8x128xf32> to vector<8x32xf32>
    %255 = arith.negf %254 : vector<8x32xf32>
    %256 = math.exp %255 : vector<8x32xf32>
    %cst_61 = arith.constant 1.000000e+00 : f32
    %257 = vector.broadcast %cst_61 : f32 to vector<8x32xf32>
    %258 = arith.addf %257, %256 : vector<8x32xf32>
    %259 = arith.divf %257, %258 : vector<8x32xf32>
    %260 = vector.extract_strided_slice %253 {offsets = [0, 32], sizes = [8, 32], strides = [1, 1]} : vector<8x128xf32> to vector<8x32xf32>
    %261 = arith.negf %260 : vector<8x32xf32>
    %262 = math.exp %261 : vector<8x32xf32>
    %cst_62 = arith.constant 1.000000e+00 : f32
    %263 = vector.broadcast %cst_62 : f32 to vector<8x32xf32>
    %264 = arith.addf %263, %262 : vector<8x32xf32>
    %265 = arith.divf %263, %264 : vector<8x32xf32>
    %266 = vector.extract_strided_slice %253 {offsets = [0, 64], sizes = [8, 32], strides = [1, 1]} : vector<8x128xf32> to vector<8x32xf32>
    %267 = math.tanh %266 : vector<8x32xf32>
    %268 = vector.extract_strided_slice %253 {offsets = [0, 96], sizes = [8, 32], strides = [1, 1]} : vector<8x128xf32> to vector<8x32xf32>
    %269 = arith.negf %268 : vector<8x32xf32>
    %270 = math.exp %269 : vector<8x32xf32>
    %cst_63 = arith.constant 1.000000e+00 : f32
    %271 = vector.broadcast %cst_63 : f32 to vector<8x32xf32>
    %272 = arith.addf %271, %270 : vector<8x32xf32>
    %273 = arith.divf %271, %272 : vector<8x32xf32>
    %274 = arith.mulf %265, %242 : vector<8x32xf32>
    %275 = arith.mulf %259, %267 : vector<8x32xf32>
    %276 = arith.addf %274, %275 : vector<8x32xf32>
    %277 = math.tanh %276 : vector<8x32xf32>
    %278 = arith.mulf %273, %277 : vector<8x32xf32>
    %279 = arith.index_cast %248 : i32 to index
    %c0_64 = arith.constant 0 : index
    %280 = vector.load %arg11[%279, %c0_64] : memref<72x32xf32, #tpu.memory_space<vmem>>, vector<8x32xf32>
    tpu.vector_store %arg11[%279, %c0_64], %278 {strides = array<i32>} : memref<72x32xf32, #tpu.memory_space<vmem>>, vector<8x32xf32>,
    %c8_i32_65 = arith.constant 8 : i32
    %c8_i32_66 = arith.constant 8 : i32
    %281 = arith.muli %c8_i32_65, %c8_i32_66 : i32
    %282 = tpu.assume_multiple %281, 8 : i32
    %283 = arith.index_cast %282 : i32 to index
    %c0_67 = arith.constant 0 : index
    %284 = vector.load %arg10[%283, %c0_67] : memref<72x128xf32, #tpu.memory_space<vmem>>, vector<8x128xf32>
    %285 = arith.truncf %278 : vector<8x32xf32> to vector<8x32xbf16>
    %cst_68 = arith.constant dense<0.000000e+00> : vector<8x128xf32>
    %286 = tpu.matmul %285, %7, %cst_68 {dimension_numbers = #tpu.dot_dimension_numbers<[1], [0], [0], [1], [0, 0, 1, 1], [], []>} : vector<8x32xbf16>, vector<32x128xbf16>, vector<8x128xf32> -> vector<8x128xf32>
    %287 = arith.addf %284, %286 : vector<8x128xf32>
    %288 = vector.extract_strided_slice %287 {offsets = [0, 0], sizes = [8, 32], strides = [1, 1]} : vector<8x128xf32> to vector<8x32xf32>
    %289 = arith.negf %288 : vector<8x32xf32>
    %290 = math.exp %289 : vector<8x32xf32>
    %cst_69 = arith.constant 1.000000e+00 : f32
    %291 = vector.broadcast %cst_69 : f32 to vector<8x32xf32>
    %292 = arith.addf %291, %290 : vector<8x32xf32>
    %293 = arith.divf %291, %292 : vector<8x32xf32>
    %294 = vector.extract_strided_slice %287 {offsets = [0, 32], sizes = [8, 32], strides = [1, 1]} : vector<8x128xf32> to vector<8x32xf32>
    %295 = arith.negf %294 : vector<8x32xf32>
    %296 = math.exp %295 : vector<8x32xf32>
    %cst_70 = arith.constant 1.000000e+00 : f32
    %297 = vector.broadcast %cst_70 : f32 to vector<8x32xf32>
    %298 = arith.addf %297, %296 : vector<8x32xf32>
    %299 = arith.divf %297, %298 : vector<8x32xf32>
    %300 = vector.extract_strided_slice %287 {offsets = [0, 64], sizes = [8, 32], strides = [1, 1]} : vector<8x128xf32> to vector<8x32xf32>
    %301 = math.tanh %300 : vector<8x32xf32>
    %302 = vector.extract_strided_slice %287 {offsets = [0, 96], sizes = [8, 32], strides = [1, 1]} : vector<8x128xf32> to vector<8x32xf32>
    %303 = arith.negf %302 : vector<8x32xf32>
    %304 = math.exp %303 : vector<8x32xf32>
    %cst_71 = arith.constant 1.000000e+00 : f32
    %305 = vector.broadcast %cst_71 : f32 to vector<8x32xf32>
    %306 = arith.addf %305, %304 : vector<8x32xf32>
    %307 = arith.divf %305, %306 : vector<8x32xf32>
    %308 = arith.mulf %299, %276 : vector<8x32xf32>
    %309 = arith.mulf %293, %301 : vector<8x32xf32>
    %310 = arith.addf %308, %309 : vector<8x32xf32>
    %311 = math.tanh %310 : vector<8x32xf32>
    %312 = arith.mulf %307, %311 : vector<8x32xf32>
    %313 = arith.index_cast %282 : i32 to index
    %c0_72 = arith.constant 0 : index
    %314 = vector.load %arg11[%313, %c0_72] : memref<72x32xf32, #tpu.memory_space<vmem>>, vector<8x32xf32>
    tpu.vector_store %arg11[%313, %c0_72], %312 {strides = array<i32>} : memref<72x32xf32, #tpu.memory_space<vmem>>, vector<8x32xf32>,
    %c9_i32 = arith.constant 9 : i32
    %c0_73 = arith.constant 0 : index
    %c0_74 = arith.constant 0 : index
    %315 = vector.load %arg11[%c0_73, %c0_74] : memref<72x32xf32, #tpu.memory_space<vmem>>, vector<72x32xf32>
    %316 = arith.truncf %315 : vector<72x32xf32> to vector<72x32xbf16>
    %c0_75 = arith.constant 0 : index
    %c0_76 = arith.constant 0 : index
    %317 = vector.load %arg4[%c0_75, %c0_76] : memref<32x128xbf16, #tpu.memory_space<vmem>>, vector<32x128xbf16>
    %cst_77 = arith.constant dense<0.000000e+00> : vector<72x128xf32>
    %318 = tpu.matmul %316, %317, %cst_77 {dimension_numbers = #tpu.dot_dimension_numbers<[1], [0], [0], [1], [0, 0, 1, 1], [], []>} : vector<72x32xbf16>, vector<32x128xbf16>, vector<72x128xf32> -> vector<72x128xf32>
    %c0_78 = arith.constant 0 : index
    %c0_79 = arith.constant 0 : index
    %319 = vector.load %arg6[%c0_78, %c0_79] : memref<1x128xf32, #tpu.memory_space<vmem>>, vector<1x128xf32>
    %320 = vector.broadcast %319 : vector<1x128xf32> to vector<72x128xf32>
    %321 = arith.addf %318, %320 : vector<72x128xf32>
    %c0_80 = arith.constant 0 : index
    %c0_81 = arith.constant 0 : index
    %322 = vector.load %arg10[%c0_80, %c0_81] : memref<72x128xf32, #tpu.memory_space<vmem>>, vector<72x128xf32>
    tpu.vector_store %arg10[%c0_80, %c0_81], %321 {strides = array<i32>} : memref<72x128xf32, #tpu.memory_space<vmem>>, vector<72x128xf32>,
    %c0_82 = arith.constant 0 : index
    %c0_83 = arith.constant 0 : index
    %323 = vector.load %arg5[%c0_82, %c0_83] : memref<32x128xbf16, #tpu.memory_space<vmem>>, vector<32x128xbf16>
    %cst_84 = arith.constant 0.000000e+00 : f32
    %324 = vector.broadcast %cst_84 : f32 to vector<8x32xf32>
    %c0_i32_85 = arith.constant 0 : i32
    %c8_i32_86 = arith.constant 8 : i32
    %325 = arith.muli %c0_i32_85, %c8_i32_86 : i32
    %326 = tpu.assume_multiple %325, 8 : i32
    %327 = arith.index_cast %326 : i32 to index
    %c0_87 = arith.constant 0 : index
    %328 = vector.load %arg10[%327, %c0_87] : memref<72x128xf32, #tpu.memory_space<vmem>>, vector<8x128xf32>
    %329 = arith.truncf %324 : vector<8x32xf32> to vector<8x32xbf16>
    %cst_88 = arith.constant dense<0.000000e+00> : vector<8x128xf32>
    %330 = tpu.matmul %329, %323, %cst_88 {dimension_numbers = #tpu.dot_dimension_numbers<[1], [0], [0], [1], [0, 0, 1, 1], [], []>} : vector<8x32xbf16>, vector<32x128xbf16>, vector<8x128xf32> -> vector<8x128xf32>
    %331 = arith.addf %328, %330 : vector<8x128xf32>
    %332 = vector.extract_strided_slice %331 {offsets = [0, 0], sizes = [8, 32], strides = [1, 1]} : vector<8x128xf32> to vector<8x32xf32>
    %333 = arith.negf %332 : vector<8x32xf32>
    %334 = math.exp %333 : vector<8x32xf32>
    %cst_89 = arith.constant 1.000000e+00 : f32
    %335 = vector.broadcast %cst_89 : f32 to vector<8x32xf32>
    %336 = arith.addf %335, %334 : vector<8x32xf32>
    %337 = arith.divf %335, %336 : vector<8x32xf32>
    %338 = vector.extract_strided_slice %331 {offsets = [0, 32], sizes = [8, 32], strides = [1, 1]} : vector<8x128xf32> to vector<8x32xf32>
    %339 = arith.negf %338 : vector<8x32xf32>
    %340 = math.exp %339 : vector<8x32xf32>
    %cst_90 = arith.constant 1.000000e+00 : f32
    %341 = vector.broadcast %cst_90 : f32 to vector<8x32xf32>
    %342 = arith.addf %341, %340 : vector<8x32xf32>
    %343 = arith.divf %341, %342 : vector<8x32xf32>
    %344 = vector.extract_strided_slice %331 {offsets = [0, 64], sizes = [8, 32], strides = [1, 1]} : vector<8x128xf32> to vector<8x32xf32>
    %345 = math.tanh %344 : vector<8x32xf32>
    %346 = vector.extract_strided_slice %331 {offsets = [0, 96], sizes = [8, 32], strides = [1, 1]} : vector<8x128xf32> to vector<8x32xf32>
    %347 = arith.negf %346 : vector<8x32xf32>
    %348 = math.exp %347 : vector<8x32xf32>
    %cst_91 = arith.constant 1.000000e+00 : f32
    %349 = vector.broadcast %cst_91 : f32 to vector<8x32xf32>
    %350 = arith.addf %349, %348 : vector<8x32xf32>
    %351 = arith.divf %349, %350 : vector<8x32xf32>
    %352 = arith.mulf %343, %324 : vector<8x32xf32>
    %353 = arith.mulf %337, %345 : vector<8x32xf32>
    %354 = arith.addf %352, %353 : vector<8x32xf32>
    %355 = math.tanh %354 : vector<8x32xf32>
    %356 = arith.mulf %351, %355 : vector<8x32xf32>
    %357 = arith.index_cast %326 : i32 to index
    %c0_92 = arith.constant 0 : index
    %358 = vector.load %arg11[%357, %c0_92] : memref<72x32xf32, #tpu.memory_space<vmem>>, vector<8x32xf32>
    tpu.vector_store %arg11[%357, %c0_92], %356 {strides = array<i32>} : memref<72x32xf32, #tpu.memory_space<vmem>>, vector<8x32xf32>,
    %c1_i32_93 = arith.constant 1 : i32
    %c8_i32_94 = arith.constant 8 : i32
    %359 = arith.muli %c1_i32_93, %c8_i32_94 : i32
    %360 = tpu.assume_multiple %359, 8 : i32
    %361 = arith.index_cast %360 : i32 to index
    %c0_95 = arith.constant 0 : index
    %362 = vector.load %arg10[%361, %c0_95] : memref<72x128xf32, #tpu.memory_space<vmem>>, vector<8x128xf32>
    %363 = arith.truncf %356 : vector<8x32xf32> to vector<8x32xbf16>
    %cst_96 = arith.constant dense<0.000000e+00> : vector<8x128xf32>
    %364 = tpu.matmul %363, %323, %cst_96 {dimension_numbers = #tpu.dot_dimension_numbers<[1], [0], [0], [1], [0, 0, 1, 1], [], []>} : vector<8x32xbf16>, vector<32x128xbf16>, vector<8x128xf32> -> vector<8x128xf32>
    %365 = arith.addf %362, %364 : vector<8x128xf32>
    %366 = vector.extract_strided_slice %365 {offsets = [0, 0], sizes = [8, 32], strides = [1, 1]} : vector<8x128xf32> to vector<8x32xf32>
    %367 = arith.negf %366 : vector<8x32xf32>
    %368 = math.exp %367 : vector<8x32xf32>
    %cst_97 = arith.constant 1.000000e+00 : f32
    %369 = vector.broadcast %cst_97 : f32 to vector<8x32xf32>
    %370 = arith.addf %369, %368 : vector<8x32xf32>
    %371 = arith.divf %369, %370 : vector<8x32xf32>
    %372 = vector.extract_strided_slice %365 {offsets = [0, 32], sizes = [8, 32], strides = [1, 1]} : vector<8x128xf32> to vector<8x32xf32>
    %373 = arith.negf %372 : vector<8x32xf32>
    %374 = math.exp %373 : vector<8x32xf32>
    %cst_98 = arith.constant 1.000000e+00 : f32
    %375 = vector.broadcast %cst_98 : f32 to vector<8x32xf32>
    %376 = arith.addf %375, %374 : vector<8x32xf32>
    %377 = arith.divf %375, %376 : vector<8x32xf32>
    %378 = vector.extract_strided_slice %365 {offsets = [0, 64], sizes = [8, 32], strides = [1, 1]} : vector<8x128xf32> to vector<8x32xf32>
    %379 = math.tanh %378 : vector<8x32xf32>
    %380 = vector.extract_strided_slice %365 {offsets = [0, 96], sizes = [8, 32], strides = [1, 1]} : vector<8x128xf32> to vector<8x32xf32>
    %381 = arith.negf %380 : vector<8x32xf32>
    %382 = math.exp %381 : vector<8x32xf32>
    %cst_99 = arith.constant 1.000000e+00 : f32
    %383 = vector.broadcast %cst_99 : f32 to vector<8x32xf32>
    %384 = arith.addf %383, %382 : vector<8x32xf32>
    %385 = arith.divf %383, %384 : vector<8x32xf32>
    %386 = arith.mulf %377, %354 : vector<8x32xf32>
    %387 = arith.mulf %371, %379 : vector<8x32xf32>
    %388 = arith.addf %386, %387 : vector<8x32xf32>
    %389 = math.tanh %388 : vector<8x32xf32>
    %390 = arith.mulf %385, %389 : vector<8x32xf32>
    %391 = arith.index_cast %360 : i32 to index
    %c0_100 = arith.constant 0 : index
    %392 = vector.load %arg11[%391, %c0_100] : memref<72x32xf32, #tpu.memory_space<vmem>>, vector<8x32xf32>
    tpu.vector_store %arg11[%391, %c0_100], %390 {strides = array<i32>} : memref<72x32xf32, #tpu.memory_space<vmem>>, vector<8x32xf32>,
    %c2_i32_101 = arith.constant 2 : i32
    %c8_i32_102 = arith.constant 8 : i32
    %393 = arith.muli %c2_i32_101, %c8_i32_102 : i32
    %394 = tpu.assume_multiple %393, 8 : i32
    %395 = arith.index_cast %394 : i32 to index
    %c0_103 = arith.constant 0 : index
    %396 = vector.load %arg10[%395, %c0_103] : memref<72x128xf32, #tpu.memory_space<vmem>>, vector<8x128xf32>
    %397 = arith.truncf %390 : vector<8x32xf32> to vector<8x32xbf16>
    %cst_104 = arith.constant dense<0.000000e+00> : vector<8x128xf32>
    %398 = tpu.matmul %397, %323, %cst_104 {dimension_numbers = #tpu.dot_dimension_numbers<[1], [0], [0], [1], [0, 0, 1, 1], [], []>} : vector<8x32xbf16>, vector<32x128xbf16>, vector<8x128xf32> -> vector<8x128xf32>
    %399 = arith.addf %396, %398 : vector<8x128xf32>
    %400 = vector.extract_strided_slice %399 {offsets = [0, 0], sizes = [8, 32], strides = [1, 1]} : vector<8x128xf32> to vector<8x32xf32>
    %401 = arith.negf %400 : vector<8x32xf32>
    %402 = math.exp %401 : vector<8x32xf32>
    %cst_105 = arith.constant 1.000000e+00 : f32
    %403 = vector.broadcast %cst_105 : f32 to vector<8x32xf32>
    %404 = arith.addf %403, %402 : vector<8x32xf32>
    %405 = arith.divf %403, %404 : vector<8x32xf32>
    %406 = vector.extract_strided_slice %399 {offsets = [0, 32], sizes = [8, 32], strides = [1, 1]} : vector<8x128xf32> to vector<8x32xf32>
    %407 = arith.negf %406 : vector<8x32xf32>
    %408 = math.exp %407 : vector<8x32xf32>
    %cst_106 = arith.constant 1.000000e+00 : f32
    %409 = vector.broadcast %cst_106 : f32 to vector<8x32xf32>
    %410 = arith.addf %409, %408 : vector<8x32xf32>
    %411 = arith.divf %409, %410 : vector<8x32xf32>
    %412 = vector.extract_strided_slice %399 {offsets = [0, 64], sizes = [8, 32], strides = [1, 1]} : vector<8x128xf32> to vector<8x32xf32>
    %413 = math.tanh %412 : vector<8x32xf32>
    %414 = vector.extract_strided_slice %399 {offsets = [0, 96], sizes = [8, 32], strides = [1, 1]} : vector<8x128xf32> to vector<8x32xf32>
    %415 = arith.negf %414 : vector<8x32xf32>
    %416 = math.exp %415 : vector<8x32xf32>
    %cst_107 = arith.constant 1.000000e+00 : f32
    %417 = vector.broadcast %cst_107 : f32 to vector<8x32xf32>
    %418 = arith.addf %417, %416 : vector<8x32xf32>
    %419 = arith.divf %417, %418 : vector<8x32xf32>
    %420 = arith.mulf %411, %388 : vector<8x32xf32>
    %421 = arith.mulf %405, %413 : vector<8x32xf32>
    %422 = arith.addf %420, %421 : vector<8x32xf32>
    %423 = math.tanh %422 : vector<8x32xf32>
    %424 = arith.mulf %419, %423 : vector<8x32xf32>
    %425 = arith.index_cast %394 : i32 to index
    %c0_108 = arith.constant 0 : index
    %426 = vector.load %arg11[%425, %c0_108] : memref<72x32xf32, #tpu.memory_space<vmem>>, vector<8x32xf32>
    tpu.vector_store %arg11[%425, %c0_108], %424 {strides = array<i32>} : memref<72x32xf32, #tpu.memory_space<vmem>>, vector<8x32xf32>,
    %c3_i32_109 = arith.constant 3 : i32
    %c8_i32_110 = arith.constant 8 : i32
    %427 = arith.muli %c3_i32_109, %c8_i32_110 : i32
    %428 = tpu.assume_multiple %427, 8 : i32
    %429 = arith.index_cast %428 : i32 to index
    %c0_111 = arith.constant 0 : index
    %430 = vector.load %arg10[%429, %c0_111] : memref<72x128xf32, #tpu.memory_space<vmem>>, vector<8x128xf32>
    %431 = arith.truncf %424 : vector<8x32xf32> to vector<8x32xbf16>
    %cst_112 = arith.constant dense<0.000000e+00> : vector<8x128xf32>
    %432 = tpu.matmul %431, %323, %cst_112 {dimension_numbers = #tpu.dot_dimension_numbers<[1], [0], [0], [1], [0, 0, 1, 1], [], []>} : vector<8x32xbf16>, vector<32x128xbf16>, vector<8x128xf32> -> vector<8x128xf32>
    %433 = arith.addf %430, %432 : vector<8x128xf32>
    %434 = vector.extract_strided_slice %433 {offsets = [0, 0], sizes = [8, 32], strides = [1, 1]} : vector<8x128xf32> to vector<8x32xf32>
    %435 = arith.negf %434 : vector<8x32xf32>
    %436 = math.exp %435 : vector<8x32xf32>
    %cst_113 = arith.constant 1.000000e+00 : f32
    %437 = vector.broadcast %cst_113 : f32 to vector<8x32xf32>
    %438 = arith.addf %437, %436 : vector<8x32xf32>
    %439 = arith.divf %437, %438 : vector<8x32xf32>
    %440 = vector.extract_strided_slice %433 {offsets = [0, 32], sizes = [8, 32], strides = [1, 1]} : vector<8x128xf32> to vector<8x32xf32>
    %441 = arith.negf %440 : vector<8x32xf32>
    %442 = math.exp %441 : vector<8x32xf32>
    %cst_114 = arith.constant 1.000000e+00 : f32
    %443 = vector.broadcast %cst_114 : f32 to vector<8x32xf32>
    %444 = arith.addf %443, %442 : vector<8x32xf32>
    %445 = arith.divf %443, %444 : vector<8x32xf32>
    %446 = vector.extract_strided_slice %433 {offsets = [0, 64], sizes = [8, 32], strides = [1, 1]} : vector<8x128xf32> to vector<8x32xf32>
    %447 = math.tanh %446 : vector<8x32xf32>
    %448 = vector.extract_strided_slice %433 {offsets = [0, 96], sizes = [8, 32], strides = [1, 1]} : vector<8x128xf32> to vector<8x32xf32>
    %449 = arith.negf %448 : vector<8x32xf32>
    %450 = math.exp %449 : vector<8x32xf32>
    %cst_115 = arith.constant 1.000000e+00 : f32
    %451 = vector.broadcast %cst_115 : f32 to vector<8x32xf32>
    %452 = arith.addf %451, %450 : vector<8x32xf32>
    %453 = arith.divf %451, %452 : vector<8x32xf32>
    %454 = arith.mulf %445, %422 : vector<8x32xf32>
    %455 = arith.mulf %439, %447 : vector<8x32xf32>
    %456 = arith.addf %454, %455 : vector<8x32xf32>
    %457 = math.tanh %456 : vector<8x32xf32>
    %458 = arith.mulf %453, %457 : vector<8x32xf32>
    %459 = arith.index_cast %428 : i32 to index
    %c0_116 = arith.constant 0 : index
    %460 = vector.load %arg11[%459, %c0_116] : memref<72x32xf32, #tpu.memory_space<vmem>>, vector<8x32xf32>
    tpu.vector_store %arg11[%459, %c0_116], %458 {strides = array<i32>} : memref<72x32xf32, #tpu.memory_space<vmem>>, vector<8x32xf32>,
    %c4_i32_117 = arith.constant 4 : i32
    %c8_i32_118 = arith.constant 8 : i32
    %461 = arith.muli %c4_i32_117, %c8_i32_118 : i32
    %462 = tpu.assume_multiple %461, 8 : i32
    %463 = arith.index_cast %462 : i32 to index
    %c0_119 = arith.constant 0 : index
    %464 = vector.load %arg10[%463, %c0_119] : memref<72x128xf32, #tpu.memory_space<vmem>>, vector<8x128xf32>
    %465 = arith.truncf %458 : vector<8x32xf32> to vector<8x32xbf16>
    %cst_120 = arith.constant dense<0.000000e+00> : vector<8x128xf32>
    %466 = tpu.matmul %465, %323, %cst_120 {dimension_numbers = #tpu.dot_dimension_numbers<[1], [0], [0], [1], [0, 0, 1, 1], [], []>} : vector<8x32xbf16>, vector<32x128xbf16>, vector<8x128xf32> -> vector<8x128xf32>
    %467 = arith.addf %464, %466 : vector<8x128xf32>
    %468 = vector.extract_strided_slice %467 {offsets = [0, 0], sizes = [8, 32], strides = [1, 1]} : vector<8x128xf32> to vector<8x32xf32>
    %469 = arith.negf %468 : vector<8x32xf32>
    %470 = math.exp %469 : vector<8x32xf32>
    %cst_121 = arith.constant 1.000000e+00 : f32
    %471 = vector.broadcast %cst_121 : f32 to vector<8x32xf32>
    %472 = arith.addf %471, %470 : vector<8x32xf32>
    %473 = arith.divf %471, %472 : vector<8x32xf32>
    %474 = vector.extract_strided_slice %467 {offsets = [0, 32], sizes = [8, 32], strides = [1, 1]} : vector<8x128xf32> to vector<8x32xf32>
    %475 = arith.negf %474 : vector<8x32xf32>
    %476 = math.exp %475 : vector<8x32xf32>
    %cst_122 = arith.constant 1.000000e+00 : f32
    %477 = vector.broadcast %cst_122 : f32 to vector<8x32xf32>
    %478 = arith.addf %477, %476 : vector<8x32xf32>
    %479 = arith.divf %477, %478 : vector<8x32xf32>
    %480 = vector.extract_strided_slice %467 {offsets = [0, 64], sizes = [8, 32], strides = [1, 1]} : vector<8x128xf32> to vector<8x32xf32>
    %481 = math.tanh %480 : vector<8x32xf32>
    %482 = vector.extract_strided_slice %467 {offsets = [0, 96], sizes = [8, 32], strides = [1, 1]} : vector<8x128xf32> to vector<8x32xf32>
    %483 = arith.negf %482 : vector<8x32xf32>
    %484 = math.exp %483 : vector<8x32xf32>
    %cst_123 = arith.constant 1.000000e+00 : f32
    %485 = vector.broadcast %cst_123 : f32 to vector<8x32xf32>
    %486 = arith.addf %485, %484 : vector<8x32xf32>
    %487 = arith.divf %485, %486 : vector<8x32xf32>
    %488 = arith.mulf %479, %456 : vector<8x32xf32>
    %489 = arith.mulf %473, %481 : vector<8x32xf32>
    %490 = arith.addf %488, %489 : vector<8x32xf32>
    %491 = math.tanh %490 : vector<8x32xf32>
    %492 = arith.mulf %487, %491 : vector<8x32xf32>
    %493 = arith.index_cast %462 : i32 to index
    %c0_124 = arith.constant 0 : index
    %494 = vector.load %arg11[%493, %c0_124] : memref<72x32xf32, #tpu.memory_space<vmem>>, vector<8x32xf32>
    tpu.vector_store %arg11[%493, %c0_124], %492 {strides = array<i32>} : memref<72x32xf32, #tpu.memory_space<vmem>>, vector<8x32xf32>,
    %c5_i32_125 = arith.constant 5 : i32
    %c8_i32_126 = arith.constant 8 : i32
    %495 = arith.muli %c5_i32_125, %c8_i32_126 : i32
    %496 = tpu.assume_multiple %495, 8 : i32
    %497 = arith.index_cast %496 : i32 to index
    %c0_127 = arith.constant 0 : index
    %498 = vector.load %arg10[%497, %c0_127] : memref<72x128xf32, #tpu.memory_space<vmem>>, vector<8x128xf32>
    %499 = arith.truncf %492 : vector<8x32xf32> to vector<8x32xbf16>
    %cst_128 = arith.constant dense<0.000000e+00> : vector<8x128xf32>
    %500 = tpu.matmul %499, %323, %cst_128 {dimension_numbers = #tpu.dot_dimension_numbers<[1], [0], [0], [1], [0, 0, 1, 1], [], []>} : vector<8x32xbf16>, vector<32x128xbf16>, vector<8x128xf32> -> vector<8x128xf32>
    %501 = arith.addf %498, %500 : vector<8x128xf32>
    %502 = vector.extract_strided_slice %501 {offsets = [0, 0], sizes = [8, 32], strides = [1, 1]} : vector<8x128xf32> to vector<8x32xf32>
    %503 = arith.negf %502 : vector<8x32xf32>
    %504 = math.exp %503 : vector<8x32xf32>
    %cst_129 = arith.constant 1.000000e+00 : f32
    %505 = vector.broadcast %cst_129 : f32 to vector<8x32xf32>
    %506 = arith.addf %505, %504 : vector<8x32xf32>
    %507 = arith.divf %505, %506 : vector<8x32xf32>
    %508 = vector.extract_strided_slice %501 {offsets = [0, 32], sizes = [8, 32], strides = [1, 1]} : vector<8x128xf32> to vector<8x32xf32>
    %509 = arith.negf %508 : vector<8x32xf32>
    %510 = math.exp %509 : vector<8x32xf32>
    %cst_130 = arith.constant 1.000000e+00 : f32
    %511 = vector.broadcast %cst_130 : f32 to vector<8x32xf32>
    %512 = arith.addf %511, %510 : vector<8x32xf32>
    %513 = arith.divf %511, %512 : vector<8x32xf32>
    %514 = vector.extract_strided_slice %501 {offsets = [0, 64], sizes = [8, 32], strides = [1, 1]} : vector<8x128xf32> to vector<8x32xf32>
    %515 = math.tanh %514 : vector<8x32xf32>
    %516 = vector.extract_strided_slice %501 {offsets = [0, 96], sizes = [8, 32], strides = [1, 1]} : vector<8x128xf32> to vector<8x32xf32>
    %517 = arith.negf %516 : vector<8x32xf32>
    %518 = math.exp %517 : vector<8x32xf32>
    %cst_131 = arith.constant 1.000000e+00 : f32
    %519 = vector.broadcast %cst_131 : f32 to vector<8x32xf32>
    %520 = arith.addf %519, %518 : vector<8x32xf32>
    %521 = arith.divf %519, %520 : vector<8x32xf32>
    %522 = arith.mulf %513, %490 : vector<8x32xf32>
    %523 = arith.mulf %507, %515 : vector<8x32xf32>
    %524 = arith.addf %522, %523 : vector<8x32xf32>
    %525 = math.tanh %524 : vector<8x32xf32>
    %526 = arith.mulf %521, %525 : vector<8x32xf32>
    %527 = arith.index_cast %496 : i32 to index
    %c0_132 = arith.constant 0 : index
    %528 = vector.load %arg11[%527, %c0_132] : memref<72x32xf32, #tpu.memory_space<vmem>>, vector<8x32xf32>
    tpu.vector_store %arg11[%527, %c0_132], %526 {strides = array<i32>} : memref<72x32xf32, #tpu.memory_space<vmem>>, vector<8x32xf32>,
    %c6_i32_133 = arith.constant 6 : i32
    %c8_i32_134 = arith.constant 8 : i32
    %529 = arith.muli %c6_i32_133, %c8_i32_134 : i32
    %530 = tpu.assume_multiple %529, 8 : i32
    %531 = arith.index_cast %530 : i32 to index
    %c0_135 = arith.constant 0 : index
    %532 = vector.load %arg10[%531, %c0_135] : memref<72x128xf32, #tpu.memory_space<vmem>>, vector<8x128xf32>
    %533 = arith.truncf %526 : vector<8x32xf32> to vector<8x32xbf16>
    %cst_136 = arith.constant dense<0.000000e+00> : vector<8x128xf32>
    %534 = tpu.matmul %533, %323, %cst_136 {dimension_numbers = #tpu.dot_dimension_numbers<[1], [0], [0], [1], [0, 0, 1, 1], [], []>} : vector<8x32xbf16>, vector<32x128xbf16>, vector<8x128xf32> -> vector<8x128xf32>
    %535 = arith.addf %532, %534 : vector<8x128xf32>
    %536 = vector.extract_strided_slice %535 {offsets = [0, 0], sizes = [8, 32], strides = [1, 1]} : vector<8x128xf32> to vector<8x32xf32>
    %537 = arith.negf %536 : vector<8x32xf32>
    %538 = math.exp %537 : vector<8x32xf32>
    %cst_137 = arith.constant 1.000000e+00 : f32
    %539 = vector.broadcast %cst_137 : f32 to vector<8x32xf32>
    %540 = arith.addf %539, %538 : vector<8x32xf32>
    %541 = arith.divf %539, %540 : vector<8x32xf32>
    %542 = vector.extract_strided_slice %535 {offsets = [0, 32], sizes = [8, 32], strides = [1, 1]} : vector<8x128xf32> to vector<8x32xf32>
    %543 = arith.negf %542 : vector<8x32xf32>
    %544 = math.exp %543 : vector<8x32xf32>
    %cst_138 = arith.constant 1.000000e+00 : f32
    %545 = vector.broadcast %cst_138 : f32 to vector<8x32xf32>
    %546 = arith.addf %545, %544 : vector<8x32xf32>
    %547 = arith.divf %545, %546 : vector<8x32xf32>
    %548 = vector.extract_strided_slice %535 {offsets = [0, 64], sizes = [8, 32], strides = [1, 1]} : vector<8x128xf32> to vector<8x32xf32>
    %549 = math.tanh %548 : vector<8x32xf32>
    %550 = vector.extract_strided_slice %535 {offsets = [0, 96], sizes = [8, 32], strides = [1, 1]} : vector<8x128xf32> to vector<8x32xf32>
    %551 = arith.negf %550 : vector<8x32xf32>
    %552 = math.exp %551 : vector<8x32xf32>
    %cst_139 = arith.constant 1.000000e+00 : f32
    %553 = vector.broadcast %cst_139 : f32 to vector<8x32xf32>
    %554 = arith.addf %553, %552 : vector<8x32xf32>
    %555 = arith.divf %553, %554 : vector<8x32xf32>
    %556 = arith.mulf %547, %524 : vector<8x32xf32>
    %557 = arith.mulf %541, %549 : vector<8x32xf32>
    %558 = arith.addf %556, %557 : vector<8x32xf32>
    %559 = math.tanh %558 : vector<8x32xf32>
    %560 = arith.mulf %555, %559 : vector<8x32xf32>
    %561 = arith.index_cast %530 : i32 to index
    %c0_140 = arith.constant 0 : index
    %562 = vector.load %arg11[%561, %c0_140] : memref<72x32xf32, #tpu.memory_space<vmem>>, vector<8x32xf32>
    tpu.vector_store %arg11[%561, %c0_140], %560 {strides = array<i32>} : memref<72x32xf32, #tpu.memory_space<vmem>>, vector<8x32xf32>,
    %c7_i32_141 = arith.constant 7 : i32
    %c8_i32_142 = arith.constant 8 : i32
    %563 = arith.muli %c7_i32_141, %c8_i32_142 : i32
    %564 = tpu.assume_multiple %563, 8 : i32
    %565 = arith.index_cast %564 : i32 to index
    %c0_143 = arith.constant 0 : index
    %566 = vector.load %arg10[%565, %c0_143] : memref<72x128xf32, #tpu.memory_space<vmem>>, vector<8x128xf32>
    %567 = arith.truncf %560 : vector<8x32xf32> to vector<8x32xbf16>
    %cst_144 = arith.constant dense<0.000000e+00> : vector<8x128xf32>
    %568 = tpu.matmul %567, %323, %cst_144 {dimension_numbers = #tpu.dot_dimension_numbers<[1], [0], [0], [1], [0, 0, 1, 1], [], []>} : vector<8x32xbf16>, vector<32x128xbf16>, vector<8x128xf32> -> vector<8x128xf32>
    %569 = arith.addf %566, %568 : vector<8x128xf32>
    %570 = vector.extract_strided_slice %569 {offsets = [0, 0], sizes = [8, 32], strides = [1, 1]} : vector<8x128xf32> to vector<8x32xf32>
    %571 = arith.negf %570 : vector<8x32xf32>
    %572 = math.exp %571 : vector<8x32xf32>
    %cst_145 = arith.constant 1.000000e+00 : f32
    %573 = vector.broadcast %cst_145 : f32 to vector<8x32xf32>
    %574 = arith.addf %573, %572 : vector<8x32xf32>
    %575 = arith.divf %573, %574 : vector<8x32xf32>
    %576 = vector.extract_strided_slice %569 {offsets = [0, 32], sizes = [8, 32], strides = [1, 1]} : vector<8x128xf32> to vector<8x32xf32>
    %577 = arith.negf %576 : vector<8x32xf32>
    %578 = math.exp %577 : vector<8x32xf32>
    %cst_146 = arith.constant 1.000000e+00 : f32
    %579 = vector.broadcast %cst_146 : f32 to vector<8x32xf32>
    %580 = arith.addf %579, %578 : vector<8x32xf32>
    %581 = arith.divf %579, %580 : vector<8x32xf32>
    %582 = vector.extract_strided_slice %569 {offsets = [0, 64], sizes = [8, 32], strides = [1, 1]} : vector<8x128xf32> to vector<8x32xf32>
    %583 = math.tanh %582 : vector<8x32xf32>
    %584 = vector.extract_strided_slice %569 {offsets = [0, 96], sizes = [8, 32], strides = [1, 1]} : vector<8x128xf32> to vector<8x32xf32>
    %585 = arith.negf %584 : vector<8x32xf32>
    %586 = math.exp %585 : vector<8x32xf32>
    %cst_147 = arith.constant 1.000000e+00 : f32
    %587 = vector.broadcast %cst_147 : f32 to vector<8x32xf32>
    %588 = arith.addf %587, %586 : vector<8x32xf32>
    %589 = arith.divf %587, %588 : vector<8x32xf32>
    %590 = arith.mulf %581, %558 : vector<8x32xf32>
    %591 = arith.mulf %575, %583 : vector<8x32xf32>
    %592 = arith.addf %590, %591 : vector<8x32xf32>
    %593 = math.tanh %592 : vector<8x32xf32>
    %594 = arith.mulf %589, %593 : vector<8x32xf32>
    %595 = arith.index_cast %564 : i32 to index
    %c0_148 = arith.constant 0 : index
    %596 = vector.load %arg11[%595, %c0_148] : memref<72x32xf32, #tpu.memory_space<vmem>>, vector<8x32xf32>
    tpu.vector_store %arg11[%595, %c0_148], %594 {strides = array<i32>} : memref<72x32xf32, #tpu.memory_space<vmem>>, vector<8x32xf32>,
    %c8_i32_149 = arith.constant 8 : i32
    %c8_i32_150 = arith.constant 8 : i32
    %597 = arith.muli %c8_i32_149, %c8_i32_150 : i32
    %598 = tpu.assume_multiple %597, 8 : i32
    %599 = arith.index_cast %598 : i32 to index
    %c0_151 = arith.constant 0 : index
    %600 = vector.load %arg10[%599, %c0_151] : memref<72x128xf32, #tpu.memory_space<vmem>>, vector<8x128xf32>
    %601 = arith.truncf %594 : vector<8x32xf32> to vector<8x32xbf16>
    %cst_152 = arith.constant dense<0.000000e+00> : vector<8x128xf32>
    %602 = tpu.matmul %601, %323, %cst_152 {dimension_numbers = #tpu.dot_dimension_numbers<[1], [0], [0], [1], [0, 0, 1, 1], [], []>} : vector<8x32xbf16>, vector<32x128xbf16>, vector<8x128xf32> -> vector<8x128xf32>
    %603 = arith.addf %600, %602 : vector<8x128xf32>
    %604 = vector.extract_strided_slice %603 {offsets = [0, 0], sizes = [8, 32], strides = [1, 1]} : vector<8x128xf32> to vector<8x32xf32>
    %605 = arith.negf %604 : vector<8x32xf32>
    %606 = math.exp %605 : vector<8x32xf32>
    %cst_153 = arith.constant 1.000000e+00 : f32
    %607 = vector.broadcast %cst_153 : f32 to vector<8x32xf32>
    %608 = arith.addf %607, %606 : vector<8x32xf32>
    %609 = arith.divf %607, %608 : vector<8x32xf32>
    %610 = vector.extract_strided_slice %603 {offsets = [0, 32], sizes = [8, 32], strides = [1, 1]} : vector<8x128xf32> to vector<8x32xf32>
    %611 = arith.negf %610 : vector<8x32xf32>
    %612 = math.exp %611 : vector<8x32xf32>
    %cst_154 = arith.constant 1.000000e+00 : f32
    %613 = vector.broadcast %cst_154 : f32 to vector<8x32xf32>
    %614 = arith.addf %613, %612 : vector<8x32xf32>
    %615 = arith.divf %613, %614 : vector<8x32xf32>
    %616 = vector.extract_strided_slice %603 {offsets = [0, 64], sizes = [8, 32], strides = [1, 1]} : vector<8x128xf32> to vector<8x32xf32>
    %617 = math.tanh %616 : vector<8x32xf32>
    %618 = vector.extract_strided_slice %603 {offsets = [0, 96], sizes = [8, 32], strides = [1, 1]} : vector<8x128xf32> to vector<8x32xf32>
    %619 = arith.negf %618 : vector<8x32xf32>
    %620 = math.exp %619 : vector<8x32xf32>
    %cst_155 = arith.constant 1.000000e+00 : f32
    %621 = vector.broadcast %cst_155 : f32 to vector<8x32xf32>
    %622 = arith.addf %621, %620 : vector<8x32xf32>
    %623 = arith.divf %621, %622 : vector<8x32xf32>
    %624 = arith.mulf %615, %592 : vector<8x32xf32>
    %625 = arith.mulf %609, %617 : vector<8x32xf32>
    %626 = arith.addf %624, %625 : vector<8x32xf32>
    %627 = math.tanh %626 : vector<8x32xf32>
    %628 = arith.mulf %623, %627 : vector<8x32xf32>
    %629 = arith.index_cast %598 : i32 to index
    %c0_156 = arith.constant 0 : index
    %630 = vector.load %arg11[%629, %c0_156] : memref<72x32xf32, #tpu.memory_space<vmem>>, vector<8x32xf32>
    tpu.vector_store %arg11[%629, %c0_156], %628 {strides = array<i32>} : memref<72x32xf32, #tpu.memory_space<vmem>>, vector<8x32xf32>,
    %c9_i32_157 = arith.constant 9 : i32
    %cst_158 = arith.constant 0.000000e+00 : f32
    %631 = vector.broadcast %cst_158 : f32 to vector<16x32xf32>
    %c0_159 = arith.constant 0 : index
    %c0_160 = arith.constant 0 : index
    %632 = vector.load %arg12[%c0_159, %c0_160] : memref<16x32xf32, #tpu.memory_space<vmem>>, vector<16x32xf32>
    tpu.vector_store %arg12[%c0_159, %c0_160], %631 {strides = array<i32>} : memref<16x32xf32, #tpu.memory_space<vmem>>, vector<16x32xf32>,
    %c0_161 = arith.constant 0 : index
    %c0_162 = arith.constant 0 : index
    %633 = vector.load %arg11[%c0_161, %c0_162] : memref<72x32xf32, #tpu.memory_space<vmem>>, vector<2x32xf32>
    %c0_163 = arith.constant 0 : index
    %c0_164 = arith.constant 0 : index
    %634 = vector.load %arg12[%c0_163, %c0_164] : memref<16x32xf32, #tpu.memory_space<vmem>>, vector<2x32xf32>
    tpu.vector_store %arg12[%c0_163, %c0_164], %633 {strides = array<i32>} : memref<16x32xf32, #tpu.memory_space<vmem>>, vector<2x32xf32>,
    %c8 = arith.constant 8 : index
    %c0_165 = arith.constant 0 : index
    %635 = vector.load %arg11[%c8, %c0_165] : memref<72x32xf32, #tpu.memory_space<vmem>>, vector<2x32xf32>
    %c2 = arith.constant 2 : index
    %c0_166 = arith.constant 0 : index
    %636 = vector.load %arg12[%c2, %c0_166] : memref<16x32xf32, #tpu.memory_space<vmem>>, vector<2x32xf32>
    tpu.vector_store %arg12[%c2, %c0_166], %635 {strides = array<i32>} : memref<16x32xf32, #tpu.memory_space<vmem>>, vector<2x32xf32>,
    %c16 = arith.constant 16 : index
    %c0_167 = arith.constant 0 : index
    %637 = vector.load %arg11[%c16, %c0_167] : memref<72x32xf32, #tpu.memory_space<vmem>>, vector<2x32xf32>
    %c4 = arith.constant 4 : index
    %c0_168 = arith.constant 0 : index
    %638 = vector.load %arg12[%c4, %c0_168] : memref<16x32xf32, #tpu.memory_space<vmem>>, vector<2x32xf32>
    tpu.vector_store %arg12[%c4, %c0_168], %637 {strides = array<i32>} : memref<16x32xf32, #tpu.memory_space<vmem>>, vector<2x32xf32>,
    %c24 = arith.constant 24 : index
    %c0_169 = arith.constant 0 : index
    %639 = vector.load %arg11[%c24, %c0_169] : memref<72x32xf32, #tpu.memory_space<vmem>>, vector<2x32xf32>
    %c6 = arith.constant 6 : index
    %c0_170 = arith.constant 0 : index
    %640 = vector.load %arg12[%c6, %c0_170] : memref<16x32xf32, #tpu.memory_space<vmem>>, vector<2x32xf32>
    tpu.vector_store %arg12[%c6, %c0_170], %639 {strides = array<i32>} : memref<16x32xf32, #tpu.memory_space<vmem>>, vector<2x32xf32>,
    %c32 = arith.constant 32 : index
    %c0_171 = arith.constant 0 : index
    %641 = vector.load %arg11[%c32, %c0_171] : memref<72x32xf32, #tpu.memory_space<vmem>>, vector<2x32xf32>
    %c8_172 = arith.constant 8 : index
    %c0_173 = arith.constant 0 : index
    %642 = vector.load %arg12[%c8_172, %c0_173] : memref<16x32xf32, #tpu.memory_space<vmem>>, vector<2x32xf32>
    tpu.vector_store %arg12[%c8_172, %c0_173], %641 {strides = array<i32>} : memref<16x32xf32, #tpu.memory_space<vmem>>, vector<2x32xf32>,
    %c40 = arith.constant 40 : index
    %c0_174 = arith.constant 0 : index
    %643 = vector.load %arg11[%c40, %c0_174] : memref<72x32xf32, #tpu.memory_space<vmem>>, vector<2x32xf32>
    %c10 = arith.constant 10 : index
    %c0_175 = arith.constant 0 : index
    %644 = vector.load %arg12[%c10, %c0_175] : memref<16x32xf32, #tpu.memory_space<vmem>>, vector<2x32xf32>
    tpu.vector_store %arg12[%c10, %c0_175], %643 {strides = array<i32>} : memref<16x32xf32, #tpu.memory_space<vmem>>, vector<2x32xf32>,
    %c48 = arith.constant 48 : index
    %c0_176 = arith.constant 0 : index
    %645 = vector.load %arg11[%c48, %c0_176] : memref<72x32xf32, #tpu.memory_space<vmem>>, vector<2x32xf32>
    %c12 = arith.constant 12 : index
    %c0_177 = arith.constant 0 : index
    %646 = vector.load %arg12[%c12, %c0_177] : memref<16x32xf32, #tpu.memory_space<vmem>>, vector<2x32xf32>
    tpu.vector_store %arg12[%c12, %c0_177], %645 {strides = array<i32>} : memref<16x32xf32, #tpu.memory_space<vmem>>, vector<2x32xf32>,
    %c56 = arith.constant 56 : index
    %c0_178 = arith.constant 0 : index
    %647 = vector.load %arg11[%c56, %c0_178] : memref<72x32xf32, #tpu.memory_space<vmem>>, vector<1x32xf32>
    %c14 = arith.constant 14 : index
    %c0_179 = arith.constant 0 : index
    %648 = vector.load %arg12[%c14, %c0_179] : memref<16x32xf32, #tpu.memory_space<vmem>>, vector<1x32xf32>
    tpu.vector_store %arg12[%c14, %c0_179], %647 {strides = array<i32>} : memref<16x32xf32, #tpu.memory_space<vmem>>, vector<1x32xf32>,
    %c64 = arith.constant 64 : index
    %c0_180 = arith.constant 0 : index
    %649 = vector.load %arg11[%c64, %c0_180] : memref<72x32xf32, #tpu.memory_space<vmem>>, vector<1x32xf32>
    %c15 = arith.constant 15 : index
    %c0_181 = arith.constant 0 : index
    %650 = vector.load %arg12[%c15, %c0_181] : memref<16x32xf32, #tpu.memory_space<vmem>>, vector<1x32xf32>
    tpu.vector_store %arg12[%c15, %c0_181], %649 {strides = array<i32>} : memref<16x32xf32, #tpu.memory_space<vmem>>, vector<1x32xf32>,
    %c0_182 = arith.constant 0 : index
    %c0_183 = arith.constant 0 : index
    %651 = vector.load %arg12[%c0_182, %c0_183] : memref<16x32xf32, #tpu.memory_space<vmem>>, vector<16x32xf32>
    %652 = arith.truncf %651 : vector<16x32xf32> to vector<16x32xbf16>
    %c0_184 = arith.constant 0 : index
    %c0_185 = arith.constant 0 : index
    %653 = vector.load %arg7[%c0_184, %c0_185] : memref<32x128xbf16, #tpu.memory_space<vmem>>, vector<32x128xbf16>
    %cst_186 = arith.constant dense<0.000000e+00> : vector<16x128xf32>
    %654 = tpu.matmul %652, %653, %cst_186 {dimension_numbers = #tpu.dot_dimension_numbers<[1], [0], [0], [1], [0, 0, 1, 1], [], []>} : vector<16x32xbf16>, vector<32x128xbf16>, vector<16x128xf32> -> vector<16x128xf32>
    %c0_187 = arith.constant 0 : index
    %c0_188 = arith.constant 0 : index
    %655 = vector.load %arg8[%c0_187, %c0_188] : memref<1x128xf32, #tpu.memory_space<vmem>>, vector<1x128xf32>
    %656 = vector.broadcast %655 : vector<1x128xf32> to vector<16x128xf32>
    %657 = arith.addf %654, %656 : vector<16x128xf32>
    %c0_189 = arith.constant 0 : index
    %c0_190 = arith.constant 0 : index
    %658 = vector.load %arg9[%c0_189, %c0_190] : memref<16x128xf32, #tpu.memory_space<vmem>>, vector<16x128xf32>
    tpu.vector_store %arg9[%c0_189, %c0_190], %657 {strides = array<i32>} : memref<16x128xf32, #tpu.memory_space<vmem>>, vector<16x128xf32>,
    return
  }
}

</mosaic_0001>

<llo_original>
// kernel: tpu_custom_call.1
$region0: #{tpu_custom_call.1}
  #allocation0 [shape = 'u32[]', space=smem, size = 0x4, offset = 0x4, fixed_abs, tag = 'smem constant byte address 0x4 - core index']
  #allocation1 [shape = 'u32[144,128]{1,0:T(1,128)}', space=vmem, size = 0x12000, scoped, tag = 'internal scratch']
  #allocation2 [shape = 'f32[72,128]{1,0:T(8,128)}', space=vmem, size = 0x9000, scoped, tag = 'scratch operand']
  #allocation3 [shape = 'f32[72,32]{1,0:T(8,128)}', space=vmem, size = 0x9000, scoped, tag = 'scratch operand']
  #allocation4 [shape = 'f32[16,32]{1,0:T(8,128)}', space=vmem, size = 0x2000, scoped, tag = 'scratch operand']
  %s0 = inlined_call_operand.vmem [shape: bf16[72,32], index: 0, kind: input, shape index: {}]
  %s1 = inlined_call_operand.vmem [shape: bf16[32,128], index: 1, kind: input, shape index: {}]
  %s2 = inlined_call_operand.vmem [shape: bf16[32,128], index: 2, kind: input, shape index: {}]
  %s3 = inlined_call_operand.vmem [shape: f32[1,128], index: 3, kind: input, shape index: {}]
  %s4 = inlined_call_operand.vmem [shape: bf16[32,128], index: 4, kind: input, shape index: {}]
  %s5 = inlined_call_operand.vmem [shape: bf16[32,128], index: 5, kind: input, shape index: {}]
  %s6 = inlined_call_operand.vmem [shape: f32[1,128], index: 6, kind: input, shape index: {}]
  %s7 = inlined_call_operand.hbm [shape: bf16[32,128], index: 7, kind: input, shape index: {}]
  %s8 = inlined_call_operand.vmem [shape: f32[1,128], index: 8, kind: input, shape index: {}]
  %s9 = inlined_call_operand.hbm [shape: f32[16,128], index: 9, kind: output, shape index: {}]
  %s10 = sld [smem:[#allocation0]]
  $region50: #{tpu_custom_call.1} parent=0
    _
  %s12 = ssub.s32 1, %s10
  %s13 = scalar_select 0, %s12, %s10
  $region1: #{tpu_custom_call.1} parent=0
    #allocation5 [shape = 'u8[8192]{0}', space=vmem, size = 0x2000, scoped, tag = 'input window, operand 7, single buffered']
    #allocation6 [shape = 's32[1]{0}', space=sflag, size = 0x4, scoped, tag = 'scoped memory for tpu_custom_call.1']
    #allocation7 [shape = 's32[1]{0}', space=sflag, size = 0x4, scoped, tag = 'scoped memory for tpu_custom_call.1']
    #allocation8 [shape = 'u8[8192]{0}', space=vmem, size = 0x2000, scoped, tag = 'output window, operand 0, single buffered']
    %14 = vsyncpa [#allocation6], 0
    %15 = vsyncpa [#allocation7], 0
    // Predicated region
    $region2: #{tpu_custom_call.1} parent=1 // pred_check
      _
    $region3: #{tpu_custom_call.1} parent=1 // pred_check_branch
      %17 = sbr.rel (0) target = $region5
    $region4: #{tpu_custom_call.1} parent=1 // pred_region
      _
    $region5: #{tpu_custom_call.1} parent=1 // pred_fallthru
      _
    // Predicated region
    $region6: #{tpu_custom_call.1} parent=1 // pred_check
      _
    $region7: #{tpu_custom_call.1} parent=1 // pred_check_branch
      %19 = sbr.rel (0) target = $region9
    $region8: #{tpu_custom_call.1} parent=1 // pred_region
      _
    $region9: #{tpu_custom_call.1} parent=1 // pred_fallthru
      _
    // Predicated region
    $region10: #{tpu_custom_call.1} parent=1 // pred_check
      _
    $region11: #{tpu_custom_call.1} parent=1 // pred_check_branch
      %21 = sbr.rel (0) target = $region13
    $region12: #{tpu_custom_call.1} parent=1 // pred_region
      _
    $region13: #{tpu_custom_call.1} parent=1 // pred_fallthru
      _
    // Predicated region
    $region14: #{tpu_custom_call.1} parent=1 // pred_check
      _
    $region15: #{tpu_custom_call.1} parent=1 // pred_check_branch
      %23 = sbr.rel (0) target = $region17
    $region16: #{tpu_custom_call.1} parent=1 // pred_region
      _
    $region17: #{tpu_custom_call.1} parent=1 // pred_fallthru
      _
    // Predicated region
    $region18: #{tpu_custom_call.1} parent=1 // pred_check
      _
    $region19: #{tpu_custom_call.1} parent=1 // pred_check_branch
      %25 = sbr.rel (0) target = $region21
    $region20: #{tpu_custom_call.1} parent=1 // pred_region
      _
    $region21: #{tpu_custom_call.1} parent=1 // pred_fallthru
      _
    // Predicated region
    $region22: #{tpu_custom_call.1} parent=1 // pred_check
      _
    $region23: #{tpu_custom_call.1} parent=1 // pred_check_branch
      %27 = sbr.rel (0) target = $region25
    $region24: #{tpu_custom_call.1} parent=1 // pred_region
      _
    $region25: #{tpu_custom_call.1} parent=1 // pred_fallthru
      _
    // Predicated region
    $region26: #{tpu_custom_call.1} parent=1 // pred_check
      _
    $region27: #{tpu_custom_call.1} parent=1 // pred_check_branch
      %29 = sbr.rel (0) target = $region29
    $region28: #{tpu_custom_call.1} parent=1 // pred_region
      _
    $region29: #{tpu_custom_call.1} parent=1 // pred_fallthru
      _
    // Predicated region
    $region30: #{tpu_custom_call.1} parent=1 // pred_check
      _
    $region31: #{tpu_custom_call.1} parent=1 // pred_check_branch
      %31 = sbr.rel (0) target = $region33
    $region32: #{tpu_custom_call.1} parent=1 // pred_region
      %s33 = ssub.s32 256, 256
      %34 = vsyncadd [#allocation6], %s33
      %s35 = sshll.u32 [#allocation5], 4
      %s36 = int_to_ptr.vmem [resolvable:$true] %s35
      %41 = dma.hbm_to_vmem [thread:$0]  %s7, 256, %s36, [#allocation6], 64, 64, 4
    $region33: #{tpu_custom_call.1} parent=1 // pred_fallthru
      _
    // Predicated region
    $region34: #{tpu_custom_call.1} parent=1 // pred_check
      _
    $region35: #{tpu_custom_call.1} parent=1 // pred_check_branch
      %43 = sbr.rel (0) target = $region37
    $region36: #{tpu_custom_call.1} parent=1 // pred_region
      _
    $region37: #{tpu_custom_call.1} parent=1 // pred_fallthru
      _
    // Predicated region
    $region38: #{tpu_custom_call.1} parent=1 // pred_check
      _
    $region39: #{tpu_custom_call.1} parent=1 // pred_check_branch
      %45 = sbr.rel (0) target = $region41
    $region40: #{tpu_custom_call.1} parent=1 // pred_region
      %46 = dma.done [#allocation6], 256
    $region41: #{tpu_custom_call.1} parent=1 // pred_fallthru
      _
    %v48 = vld [vmem:[%s0] sm:$0xf]
    %v49 = vld [vmem:[%s0 + $0x4] sm:$0xf]
    %v50 = vld [vmem:[%s0 + $0x8] sm:$0xf]
    %v51 = vld [vmem:[%s0 + $0xc] sm:$0xf]
    %v52 = vld [vmem:[%s0 + $0x10] sm:$0xf]
    %v53 = vld [vmem:[%s0 + $0x14] sm:$0xf]
    %v54 = vld [vmem:[%s0 + $0x18] sm:$0xf]
    %v55 = vld [vmem:[%s0 + $0x1c] sm:$0xf]
    %v56 = vld [vmem:[%s0 + $0x20] sm:$0xf]
    %v57 = vld [vmem:[%s1] sm:$0xf]
    %v58 = vld [vmem:[%s1 + $0x4] sm:$0xf]
    %v59 = vld [vmem:[%s1 + $0x8] sm:$0xf]
    %v60 = vld [vmem:[%s1 + $0xc] sm:$0xf]
    %v61 = vld [vmem:[%s3] sm:$0x1]
    %v63 = vlaneseq
    %v64 = vshrl.u32 %v63, 7
    %v65 = vsub.s32 0, %v64
    %v66 = vrot.slane %v61, %v65
    %v77 = vunpack.c.l.b16 %v48
    %v78 = vunpack.c.l.b16 %v49
    %v79 = vunpack.c.l.b16 %v50
    %v80 = vunpack.c.l.b16 %v51
    %v81 = vunpack.c.l.b16 %v52
    %v82 = vunpack.c.l.b16 %v53
    %v83 = vunpack.c.l.b16 %v54
    %v84 = vunpack.c.l.b16 %v55
    %v85 = vunpack.c.l.b16 %v56
    %v86 = vpack.c.b16 %v78, %v77
    %v87 = vpack.c.b16 %v80, %v79
    %v88 = vpack.c.b16 %v82, %v81
    %v89 = vpack.c.b16 %v84, %v83
    %v90 = vpack.c.b16 %v85, %v85
    %v95 = vunpack.c.l.b16 %v57
    %v96 = vunpack.c.l.b16 %v58
    %v97 = vunpack.c.l.b16 %v59
    %v98 = vunpack.c.l.b16 %v60
    %v99 = vpack.c.b16 %v96, %v95
    %v100 = vpack.c.b16 %v98, %v97
    %vm103 = vcmask 261120
    %v105 = vsel %vm103, %v86, 0
    %v108 = vsel %vm103, %v87, 0
    %v111 = vsel %vm103, %v88, 0
    %v114 = vsel %vm103, %v89, 0
    %v117 = vsel %vm103, %v90, 0
    %119 = vmatprep.subr.bf16.mxu0 0
    %120 = vmatpush1.bf16.msra.mxu0 %v99
    %121 = vmatprep.subr.bf16.mxu0 0
    %122 = vmatpush1.bf16.msra.mxu0 %v100
    %123 = vmatprep.subr.bf16.mxu0 0
    %124 = vmatpush1.bf16.msra.mxu0 0
    %125 = vmatprep.subr.bf16.mxu0 0
    %126 = vmatpush1.bf16.msra.mxu0 0
    %127 = vmatprep.subr.bf16.mxu0 0
    %128 = vmatpush1.bf16.msra.mxu0 0
    %129 = vmatprep.subr.bf16.mxu0 0
    %130 = vmatpush1.bf16.msra.mxu0 0
    %131 = vmatprep.subr.bf16.mxu0 0
    %132 = vmatpush1.bf16.msra.mxu0 0
    %133 = vmatprep.subr.bf16.mxu0 0
    %134 = vmatpush1.bf16.msra.mxu0 0
    %135 = vmatprep.subr.bf16.mxu0 0
    %136 = vmatpush1.bf16.msra.mxu0 0
    %137 = vmatprep.subr.bf16.mxu0 0
    %138 = vmatpush1.bf16.msra.mxu0 0
    %139 = vmatprep.subr.bf16.mxu0 0
    %140 = vmatpush1.bf16.msra.mxu0 0
    %141 = vmatprep.subr.bf16.mxu0 0
    %142 = vmatpush1.bf16.msra.mxu0 0
    %143 = vmatprep.subr.bf16.mxu0 0
    %144 = vmatpush1.bf16.msra.mxu0 0
    %145 = vmatprep.subr.bf16.mxu0 0
    %146 = vmatpush1.bf16.msra.mxu0 0
    %147 = vmatprep.subr.bf16.mxu0 0
    %148 = vmatpush1.bf16.msra.mxu0 0
    %149 = vmatprep.subr.bf16.mxu0 0
    %150 = vmatpush1.bf16.msra.mxu0 0
    %151 = vmatprep.mubr.bf16.mxu0 0
    %152 = vmatmul.mubr.bf16.gmra.mrb[0].mxu0 %v105
    %v153 = vpop.f32.mrb[0].mxu0
    %v154 = vadd.f32 %v66, %v153
    %v155 = vpop.f32.mrb[0].mxu0
    %v156 = vpop.f32.mrb[0].mxu0
    %v157 = vadd.f32 %v66, %v156
    %v158 = vpop.f32.mrb[0].mxu0
    %159 = vmatprep.mubr.bf16.mxu0 0
    %160 = vmatmul.mubr.bf16.gmra.mrb[0].mxu0 %v108
    %v161 = vpop.f32.mrb[0].mxu0
    %v162 = vadd.f32 %v66, %v161
    %v163 = vpop.f32.mrb[0].mxu0
    %v164 = vpop.f32.mrb[0].mxu0
    %v165 = vadd.f32 %v66, %v164
    %v166 = vpop.f32.mrb[0].mxu0
    %167 = vmatprep.mubr.bf16.mxu0 0
    %168 = vmatmul.mubr.bf16.gmra.mrb[0].mxu0 %v111
    %v169 = vpop.f32.mrb[0].mxu0
    %v170 = vadd.f32 %v66, %v169
    %v171 = vpop.f32.mrb[0].mxu0
    %v172 = vpop.f32.mrb[0].mxu0
    %v173 = vadd.f32 %v66, %v172
    %v174 = vpop.f32.mrb[0].mxu0
    %175 = vmatprep.mubr.bf16.mxu0 0
    %176 = vmatmul.mubr.bf16.gmra.mrb[0].mxu0 %v114
    %v177 = vpop.f32.mrb[0].mxu0
    %v178 = vadd.f32 %v66, %v177
    %v179 = vpop.f32.mrb[0].mxu0
    %v180 = vpop.f32.mrb[0].mxu0
    %v181 = vadd.f32 %v66, %v180
    %v182 = vpop.f32.mrb[0].mxu0
    %183 = vmatprep.mubr.bf16.mxu0 0
    %184 = vmatmul.mubr.bf16.gmra.mrb[0].mxu0 %v117
    %v185 = vpop.f32.mrb[0].mxu0
    %v186 = vadd.f32 %v66, %v185
    %v187 = vpop.f32.mrb[0].mxu0
    %v188 = vpop.f32.mrb[0].mxu0
    %v189 = vpop.f32.mrb[0].mxu0
    %190 = vdwg.mxu0
    %191 = vst [vmem:[#allocation2] sm:$0xff] %v154
    %192 = vst [vmem:[#allocation2 + $0x8] sm:$0xff] %v157
    %193 = vst [vmem:[#allocation2 + $0x10] sm:$0xff] %v162
    %194 = vst [vmem:[#allocation2 + $0x18] sm:$0xff] %v165
    %195 = vst [vmem:[#allocation2 + $0x20] sm:$0xff] %v170
    %196 = vst [vmem:[#allocation2 + $0x28] sm:$0xff] %v173
    %197 = vst [vmem:[#allocation2 + $0x30] sm:$0xff] %v178
    %198 = vst [vmem:[#allocation2 + $0x38] sm:$0xff] %v181
    %199 = vst [vmem:[#allocation2 + $0x40] sm:$0xff] %v186
    %v200 = vld [vmem:[%s2] sm:$0xf]
    %v201 = vld [vmem:[%s2 + $0x4] sm:$0xf]
    %v202 = vld [vmem:[%s2 + $0x8] sm:$0xf]
    %v203 = vld [vmem:[%s2 + $0xc] sm:$0xf]
    %v204 = vld [vmem:[#allocation2] sm:$0xff]
    %v209 = vunpack.c.l.b16 %v200
    %v210 = vunpack.c.l.b16 %v201
    %v211 = vunpack.c.l.b16 %v202
    %v212 = vunpack.c.l.b16 %v203
    %v213 = vpack.c.b16 %v210, %v209
    %v214 = vpack.c.b16 %v212, %v211
    %v218 = vsel %vm103, 0, 0
    %220 = vmatprep.subr.bf16.mxu0 0
    %221 = vmatpush1.bf16.msra.mxu0 %v213
    %222 = vmatprep.subr.bf16.mxu0 0
    %223 = vmatpush1.bf16.msra.mxu0 %v214
    %224 = vmatprep.subr.bf16.mxu0 0
    %225 = vmatpush1.bf16.msra.mxu0 0
    %226 = vmatprep.subr.bf16.mxu0 0
    %227 = vmatpush1.bf16.msra.mxu0 0
    %228 = vmatprep.subr.bf16.mxu0 0
    %229 = vmatpush1.bf16.msra.mxu0 0
    %230 = vmatprep.subr.bf16.mxu0 0
    %231 = vmatpush1.bf16.msra.mxu0 0
    %232 = vmatprep.subr.bf16.mxu0 0
    %233 = vmatpush1.bf16.msra.mxu0 0
    %234 = vmatprep.subr.bf16.mxu0 0
    %235 = vmatpush1.bf16.msra.mxu0 0
    %236 = vmatprep.subr.bf16.mxu0 0
    %237 = vmatpush1.bf16.msra.mxu0 0
    %238 = vmatprep.subr.bf16.mxu0 0
    %239 = vmatpush1.bf16.msra.mxu0 0
    %240 = vmatprep.subr.bf16.mxu0 0
    %241 = vmatpush1.bf16.msra.mxu0 0
    %242 = vmatprep.subr.bf16.mxu0 0
    %243 = vmatpush1.bf16.msra.mxu0 0
    %244 = vmatprep.subr.bf16.mxu0 0
    %245 = vmatpush1.bf16.msra.mxu0 0
    %246 = vmatprep.subr.bf16.mxu0 0
    %247 = vmatpush1.bf16.msra.mxu0 0
    %248 = vmatprep.subr.bf16.mxu0 0
    %249 = vmatpush1.bf16.msra.mxu0 0
    %250 = vmatprep.subr.bf16.mxu0 0
    %251 = vmatpush1.bf16.msra.mxu0 0
    %252 = vmatprep.mubr.bf16.mxu0 0
    %253 = vmatmul.mubr.bf16.gmra.mrb[0].mxu0 %v218
    %v254 = vpop.f32.mrb[0].mxu0
    %v255 = vadd.f32 0.0, %v254
    %v256 = vpop.f32.mrb[0].mxu0
    %v257 = vpop.f32.mrb[0].mxu0
    %v258 = vpop.f32.mrb[0].mxu0
    %259 = vdwg.mxu0
    %v260 = vadd.f32 %v204, %v255
    %v261 = vxor.u32 %v260, 2147483648
    %v262 = vmul.f32 %v261, 1.442695
    %v263 = vpow.pop %v262
    %v264 = vadd.f32 %v263, 1.0
    %v265 = vrcp.pop %v264
    %v266 = vmul.f32 1.0, %v265
    %v267 = vtanh.pop %v260
    %v268 = vmul.f32 %v266, 0.0
    %270 = vrot.lane.b32.xlu0 %v267, 64
    %v271 = vpop.permute.xlu0 %270
    %v273 = vmul.f32 %v266, %v271
    %275 = vrot.lane.b32.xlu0 %v273, 32
    %v276 = vpop.permute.xlu0 %275
    %v278 = vadd.f32 %v268, %v276
    %v279 = vtanh.pop %v278
    %281 = vrot.lane.b32.xlu0 %v279, 64
    %v282 = vpop.permute.xlu0 %281
    %v284 = vmul.f32 %v266, %v282
    %286 = vrot.lane.b32.xlu0 %v284, 32
    %v287 = vpop.permute.xlu0 %286
    %289 = vst.msk [vmem:[#allocation3] sm:$0xff] %vm103, %v287
    %s290 = scalar_lea.vmem [#allocation2], 8
    %v291 = vld [vmem:[%s290] sm:$0xff]
    %v292 = vpack.c.bf16 %v284, %v284
    %294 = vrot.lane.b32.xlu0 %v292, 32
    %v295 = vpop.permute.xlu0 %294
    %v297 = vsel %vm103, %v295, 0
    %299 = vmatprep.subr.bf16.mxu0 0
    %300 = vmatpush1.bf16.msra.mxu0 %v213
    %301 = vmatprep.subr.bf16.mxu0 0
    %302 = vmatpush1.bf16.msra.mxu0 %v214
    %303 = vmatprep.subr.bf16.mxu0 0
    %304 = vmatpush1.bf16.msra.mxu0 0
    %305 = vmatprep.subr.bf16.mxu0 0
    %306 = vmatpush1.bf16.msra.mxu0 0
    %307 = vmatprep.subr.bf16.mxu0 0
    %308 = vmatpush1.bf16.msra.mxu0 0
    %309 = vmatprep.subr.bf16.mxu0 0
    %310 = vmatpush1.bf16.msra.mxu0 0
    %311 = vmatprep.subr.bf16.mxu0 0
    %312 = vmatpush1.bf16.msra.mxu0 0
    %313 = vmatprep.subr.bf16.mxu0 0
    %314 = vmatpush1.bf16.msra.mxu0 0
    %315 = vmatprep.subr.bf16.mxu0 0
    %316 = vmatpush1.bf16.msra.mxu0 0
    %317 = vmatprep.subr.bf16.mxu0 0
    %318 = vmatpush1.bf16.msra.mxu0 0
    %319 = vmatprep.subr.bf16.mxu0 0
    %320 = vmatpush1.bf16.msra.mxu0 0
    %321 = vmatprep.subr.bf16.mxu0 0
    %322 = vmatpush1.bf16.msra.mxu0 0
    %323 = vmatprep.subr.bf16.mxu0 0
    %324 = vmatpush1.bf16.msra.mxu0 0
    %325 = vmatprep.subr.bf16.mxu0 0
    %326 = vmatpush1.bf16.msra.mxu0 0
    %327 = vmatprep.subr.bf16.mxu0 0
    %328 = vmatpush1.bf16.msra.mxu0 0
    %329 = vmatprep.subr.bf16.mxu0 0
    %330 = vmatpush1.bf16.msra.mxu0 0
    %331 = vmatprep.mubr.bf16.mxu0 0
    %332 = vmatmul.mubr.bf16.gmra.mrb[0].mxu0 %v297
    %v333 = vpop.f32.mrb[0].mxu0
    %v334 = vadd.f32 0.0, %v333
    %v335 = vpop.f32.mrb[0].mxu0
    %v336 = vpop.f32.mrb[0].mxu0
    %v337 = vpop.f32.mrb[0].mxu0
    %338 = vdwg.mxu0
    %v339 = vadd.f32 %v291, %v334
    %v340 = vxor.u32 %v339, 2147483648
    %v341 = vmul.f32 %v340, 1.442695
    %v342 = vpow.pop %v341
    %v343 = vadd.f32 %v342, 1.0
    %v344 = vrcp.pop %v343
    %v345 = vmul.f32 1.0, %v344
    %v346 = vtanh.pop %v339
    %v347 = vmul.f32 %v345, %v278
    %349 = vrot.lane.b32.xlu0 %v346, 64
    %v350 = vpop.permute.xlu0 %349
    %v352 = vmul.f32 %v345, %v350
    %354 = vrot.lane.b32.xlu0 %v352, 32
    %v355 = vpop.permute.xlu0 %354
    %v357 = vadd.f32 %v347, %v355
    %v358 = vtanh.pop %v357
    %360 = vrot.lane.b32.xlu0 %v358, 64
    %v361 = vpop.permute.xlu0 %360
    %v363 = vmul.f32 %v345, %v361
    %365 = vrot.lane.b32.xlu0 %v363, 32
    %v366 = vpop.permute.xlu0 %365
    %s368 = scalar_lea.vmem [#allocation3], 8
    %369 = vst.msk [vmem:[%s368] sm:$0xff] %vm103, %v366
    %s370 = scalar_lea.vmem [#allocation2], 16
    %v371 = vld [vmem:[%s370] sm:$0xff]
    %v372 = vpack.c.bf16 %v363, %v363
    %374 = vrot.lane.b32.xlu0 %v372, 32
    %v375 = vpop.permute.xlu0 %374
    %v377 = vsel %vm103, %v375, 0
    %379 = vmatprep.subr.bf16.mxu0 0
    %380 = vmatpush1.bf16.msra.mxu0 %v213
    %381 = vmatprep.subr.bf16.mxu0 0
    %382 = vmatpush1.bf16.msra.mxu0 %v214
    %383 = vmatprep.subr.bf16.mxu0 0
    %384 = vmatpush1.bf16.msra.mxu0 0
    %385 = vmatprep.subr.bf16.mxu0 0
    %386 = vmatpush1.bf16.msra.mxu0 0
    %387 = vmatprep.subr.bf16.mxu0 0
    %388 = vmatpush1.bf16.msra.mxu0 0
    %389 = vmatprep.subr.bf16.mxu0 0
    %390 = vmatpush1.bf16.msra.mxu0 0
    %391 = vmatprep.subr.bf16.mxu0 0
    %392 = vmatpush1.bf16.msra.mxu0 0
    %393 = vmatprep.subr.bf16.mxu0 0
    %394 = vmatpush1.bf16.msra.mxu0 0
    %395 = vmatprep.subr.bf16.mxu0 0
    %396 = vmatpush1.bf16.msra.mxu0 0
    %397 = vmatprep.subr.bf16.mxu0 0
    %398 = vmatpush1.bf16.msra.mxu0 0
    %399 = vmatprep.subr.bf16.mxu0 0
    %400 = vmatpush1.bf16.msra.mxu0 0
    %401 = vmatprep.subr.bf16.mxu0 0
    %402 = vmatpush1.bf16.msra.mxu0 0
    %403 = vmatprep.subr.bf16.mxu0 0
    %404 = vmatpush1.bf16.msra.mxu0 0
    %405 = vmatprep.subr.bf16.mxu0 0
    %406 = vmatpush1.bf16.msra.mxu0 0
    %407 = vmatprep.subr.bf16.mxu0 0
    %408 = vmatpush1.bf16.msra.mxu0 0
    %409 = vmatprep.subr.bf16.mxu0 0
    %410 = vmatpush1.bf16.msra.mxu0 0
    %411 = vmatprep.mubr.bf16.mxu0 0
    %412 = vmatmul.mubr.bf16.gmra.mrb[0].mxu0 %v377
    %v413 = vpop.f32.mrb[0].mxu0
    %v414 = vadd.f32 0.0, %v413
    %v415 = vpop.f32.mrb[0].mxu0
    %v416 = vpop.f32.mrb[0].mxu0
    %v417 = vpop.f32.mrb[0].mxu0
    %418 = vdwg.mxu0
    %v419 = vadd.f32 %v371, %v414
    %v420 = vxor.u32 %v419, 2147483648
    %v421 = vmul.f32 %v420, 1.442695
    %v422 = vpow.pop %v421
    %v423 = vadd.f32 %v422, 1.0
    %v424 = vrcp.pop %v423
    %v425 = vmul.f32 1.0, %v424
    %v426 = vtanh.pop %v419
    %v427 = vmul.f32 %v425, %v357
    %429 = vrot.lane.b32.xlu0 %v426, 64
    %v430 = vpop.permute.xlu0 %429
    %v432 = vmul.f32 %v425, %v430
    %434 = vrot.lane.b32.xlu0 %v432, 32
    %v435 = vpop.permute.xlu0 %434
    %v437 = vadd.f32 %v427, %v435
    %v438 = vtanh.pop %v437
    %440 = vrot.lane.b32.xlu0 %v438, 64
    %v441 = vpop.permute.xlu0 %440
    %v443 = vmul.f32 %v425, %v441
    %445 = vrot.lane.b32.xlu0 %v443, 32
    %v446 = vpop.permute.xlu0 %445
    %s448 = scalar_lea.vmem [#allocation3], 16
    %449 = vst.msk [vmem:[%s448] sm:$0xff] %vm103, %v446
    %s450 = scalar_lea.vmem [#allocation2], 24
    %v451 = vld [vmem:[%s450] sm:$0xff]
    %v452 = vpack.c.bf16 %v443, %v443
    %454 = vrot.lane.b32.xlu0 %v452, 32
    %v455 = vpop.permute.xlu0 %454
    %v457 = vsel %vm103, %v455, 0
    %459 = vmatprep.subr.bf16.mxu0 0
    %460 = vmatpush1.bf16.msra.mxu0 %v213
    %461 = vmatprep.subr.bf16.mxu0 0
    %462 = vmatpush1.bf16.msra.mxu0 %v214
    %463 = vmatprep.subr.bf16.mxu0 0
    %464 = vmatpush1.bf16.msra.mxu0 0
    %465 = vmatprep.subr.bf16.mxu0 0
    %466 = vmatpush1.bf16.msra.mxu0 0
    %467 = vmatprep.subr.bf16.mxu0 0
    %468 = vmatpush1.bf16.msra.mxu0 0
    %469 = vmatprep.subr.bf16.mxu0 0
    %470 = vmatpush1.bf16.msra.mxu0 0
    %471 = vmatprep.subr.bf16.mxu0 0
    %472 = vmatpush1.bf16.msra.mxu0 0
    %473 = vmatprep.subr.bf16.mxu0 0
    %474 = vmatpush1.bf16.msra.mxu0 0
    %475 = vmatprep.subr.bf16.mxu0 0
    %476 = vmatpush1.bf16.msra.mxu0 0
    %477 = vmatprep.subr.bf16.mxu0 0
    %478 = vmatpush1.bf16.msra.mxu0 0
    %479 = vmatprep.subr.bf16.mxu0 0
    %480 = vmatpush1.bf16.msra.mxu0 0
    %481 = vmatprep.subr.bf16.mxu0 0
    %482 = vmatpush1.bf16.msra.mxu0 0
    %483 = vmatprep.subr.bf16.mxu0 0
    %484 = vmatpush1.bf16.msra.mxu0 0
    %485 = vmatprep.subr.bf16.mxu0 0
    %486 = vmatpush1.bf16.msra.mxu0 0
    %487 = vmatprep.subr.bf16.mxu0 0
    %488 = vmatpush1.bf16.msra.mxu0 0
    %489 = vmatprep.subr.bf16.mxu0 0
    %490 = vmatpush1.bf16.msra.mxu0 0
    %491 = vmatprep.mubr.bf16.mxu0 0
    %492 = vmatmul.mubr.bf16.gmra.mrb[0].mxu0 %v457
    %v493 = vpop.f32.mrb[0].mxu0
    %v494 = vadd.f32 0.0, %v493
    %v495 = vpop.f32.mrb[0].mxu0
    %v496 = vpop.f32.mrb[0].mxu0
    %v497 = vpop.f32.mrb[0].mxu0
    %498 = vdwg.mxu0
    %v499 = vadd.f32 %v451, %v494
    %v500 = vxor.u32 %v499, 2147483648
    %v501 = vmul.f32 %v500, 1.442695
    %v502 = vpow.pop %v501
    %v503 = vadd.f32 %v502, 1.0
    %v504 = vrcp.pop %v503
    %v505 = vmul.f32 1.0, %v504
    %v506 = vtanh.pop %v499
    %v507 = vmul.f32 %v505, %v437
    %509 = vrot.lane.b32.xlu0 %v506, 64
    %v510 = vpop.permute.xlu0 %509
    %v512 = vmul.f32 %v505, %v510
    %514 = vrot.lane.b32.xlu0 %v512, 32
    %v515 = vpop.permute.xlu0 %514
    %v517 = vadd.f32 %v507, %v515
    %v518 = vtanh.pop %v517
    %520 = vrot.lane.b32.xlu0 %v518, 64
    %v521 = vpop.permute.xlu0 %520
    %v523 = vmul.f32 %v505, %v521
    %525 = vrot.lane.b32.xlu0 %v523, 32
    %v526 = vpop.permute.xlu0 %525
    %s528 = scalar_lea.vmem [#allocation3], 24
    %529 = vst.msk [vmem:[%s528] sm:$0xff] %vm103, %v526
    %s530 = scalar_lea.vmem [#allocation2], 32
    %v531 = vld [vmem:[%s530] sm:$0xff]
    %v532 = vpack.c.bf16 %v523, %v523
    %534 = vrot.lane.b32.xlu0 %v532, 32
    %v535 = vpop.permute.xlu0 %534
    %v537 = vsel %vm103, %v535, 0
    %539 = vmatprep.subr.bf16.mxu0 0
    %540 = vmatpush1.bf16.msra.mxu0 %v213
    %541 = vmatprep.subr.bf16.mxu0 0
    %542 = vmatpush1.bf16.msra.mxu0 %v214
    %543 = vmatprep.subr.bf16.mxu0 0
    %544 = vmatpush1.bf16.msra.mxu0 0
    %545 = vmatprep.subr.bf16.mxu0 0
    %546 = vmatpush1.bf16.msra.mxu0 0
    %547 = vmatprep.subr.bf16.mxu0 0
    %548 = vmatpush1.bf16.msra.mxu0 0
    %549 = vmatprep.subr.bf16.mxu0 0
    %550 = vmatpush1.bf16.msra.mxu0 0
    %551 = vmatprep.subr.bf16.mxu0 0
    %552 = vmatpush1.bf16.msra.mxu0 0
    %553 = vmatprep.subr.bf16.mxu0 0
    %554 = vmatpush1.bf16.msra.mxu0 0
    %555 = vmatprep.subr.bf16.mxu0 0
    %556 = vmatpush1.bf16.msra.mxu0 0
    %557 = vmatprep.subr.bf16.mxu0 0
    %558 = vmatpush1.bf16.msra.mxu0 0
    %559 = vmatprep.subr.bf16.mxu0 0
    %560 = vmatpush1.bf16.msra.mxu0 0
    %561 = vmatprep.subr.bf16.mxu0 0
    %562 = vmatpush1.bf16.msra.mxu0 0
    %563 = vmatprep.subr.bf16.mxu0 0
    %564 = vmatpush1.bf16.msra.mxu0 0
    %565 = vmatprep.subr.bf16.mxu0 0
    %566 = vmatpush1.bf16.msra.mxu0 0
    %567 = vmatprep.subr.bf16.mxu0 0
    %568 = vmatpush1.bf16.msra.mxu0 0
    %569 = vmatprep.subr.bf16.mxu0 0
    %570 = vmatpush1.bf16.msra.mxu0 0
    %571 = vmatprep.mubr.bf16.mxu0 0
    %572 = vmatmul.mubr.bf16.gmra.mrb[0].mxu0 %v537
    %v573 = vpop.f32.mrb[0].mxu0
    %v574 = vadd.f32 0.0, %v573
    %v575 = vpop.f32.mrb[0].mxu0
    %v576 = vpop.f32.mrb[0].mxu0
    %v577 = vpop.f32.mrb[0].mxu0
    %578 = vdwg.mxu0
    %v579 = vadd.f32 %v531, %v574
    %v580 = vxor.u32 %v579, 2147483648
    %v581 = vmul.f32 %v580, 1.442695
    %v582 = vpow.pop %v581
    %v583 = vadd.f32 %v582, 1.0
    %v584 = vrcp.pop %v583
    %v585 = vmul.f32 1.0, %v584
    %v586 = vtanh.pop %v579
    %v587 = vmul.f32 %v585, %v517
    %589 = vrot.lane.b32.xlu0 %v586, 64
    %v590 = vpop.permute.xlu0 %589
    %v592 = vmul.f32 %v585, %v590
    %594 = vrot.lane.b32.xlu0 %v592, 32
    %v595 = vpop.permute.xlu0 %594
    %v597 = vadd.f32 %v587, %v595
    %v598 = vtanh.pop %v597
    %600 = vrot.lane.b32.xlu0 %v598, 64
    %v601 = vpop.permute.xlu0 %600
    %v603 = vmul.f32 %v585, %v601
    %605 = vrot.lane.b32.xlu0 %v603, 32
    %v606 = vpop.permute.xlu0 %605
    %s608 = scalar_lea.vmem [#allocation3], 32
    %609 = vst.msk [vmem:[%s608] sm:$0xff] %vm103, %v606
    %s610 = scalar_lea.vmem [#allocation2], 40
    %v611 = vld [vmem:[%s610] sm:$0xff]
    %v612 = vpack.c.bf16 %v603, %v603
    %614 = vrot.lane.b32.xlu0 %v612, 32
    %v615 = vpop.permute.xlu0 %614
    %v617 = vsel %vm103, %v615, 0
    %619 = vmatprep.subr.bf16.mxu0 0
    %620 = vmatpush1.bf16.msra.mxu0 %v213
    %621 = vmatprep.subr.bf16.mxu0 0
    %622 = vmatpush1.bf16.msra.mxu0 %v214
    %623 = vmatprep.subr.bf16.mxu0 0
    %624 = vmatpush1.bf16.msra.mxu0 0
    %625 = vmatprep.subr.bf16.mxu0 0
    %626 = vmatpush1.bf16.msra.mxu0 0
    %627 = vmatprep.subr.bf16.mxu0 0
    %628 = vmatpush1.bf16.msra.mxu0 0
    %629 = vmatprep.subr.bf16.mxu0 0
    %630 = vmatpush1.bf16.msra.mxu0 0
    %631 = vmatprep.subr.bf16.mxu0 0
    %632 = vmatpush1.bf16.msra.mxu0 0
    %633 = vmatprep.subr.bf16.mxu0 0
    %634 = vmatpush1.bf16.msra.mxu0 0
    %635 = vmatprep.subr.bf16.mxu0 0
    %636 = vmatpush1.bf16.msra.mxu0 0
    %637 = vmatprep.subr.bf16.mxu0 0
    %638 = vmatpush1.bf16.msra.mxu0 0
    %639 = vmatprep.subr.bf16.mxu0 0
    %640 = vmatpush1.bf16.msra.mxu0 0
    %641 = vmatprep.subr.bf16.mxu0 0
    %642 = vmatpush1.bf16.msra.mxu0 0
    %643 = vmatprep.subr.bf16.mxu0 0
    %644 = vmatpush1.bf16.msra.mxu0 0
    %645 = vmatprep.subr.bf16.mxu0 0
    %646 = vmatpush1.bf16.msra.mxu0 0
    %647 = vmatprep.subr.bf16.mxu0 0
    %648 = vmatpush1.bf16.msra.mxu0 0
    %649 = vmatprep.subr.bf16.mxu0 0
    %650 = vmatpush1.bf16.msra.mxu0 0
    %651 = vmatprep.mubr.bf16.mxu0 0
    %652 = vmatmul.mubr.bf16.gmra.mrb[0].mxu0 %v617
    %v653 = vpop.f32.mrb[0].mxu0
    %v654 = vadd.f32 0.0, %v653
    %v655 = vpop.f32.mrb[0].mxu0
    %v656 = vpop.f32.mrb[0].mxu0
    %v657 = vpop.f32.mrb[0].mxu0
    %658 = vdwg.mxu0
    %v659 = vadd.f32 %v611, %v654
    %v660 = vxor.u32 %v659, 2147483648
    %v661 = vmul.f32 %v660, 1.442695
    %v662 = vpow.pop %v661
    %v663 = vadd.f32 %v662, 1.0
    %v664 = vrcp.pop %v663
    %v665 = vmul.f32 1.0, %v664
    %v666 = vtanh.pop %v659
    %v667 = vmul.f32 %v665, %v597
    %669 = vrot.lane.b32.xlu0 %v666, 64
    %v670 = vpop.permute.xlu0 %669
    %v672 = vmul.f32 %v665, %v670
    %674 = vrot.lane.b32.xlu0 %v672, 32
    %v675 = vpop.permute.xlu0 %674
    %v677 = vadd.f32 %v667, %v675
    %v678 = vtanh.pop %v677
    %680 = vrot.lane.b32.xlu0 %v678, 64
    %v681 = vpop.permute.xlu0 %680
    %v683 = vmul.f32 %v665, %v681
    %685 = vrot.lane.b32.xlu0 %v683, 32
    %v686 = vpop.permute.xlu0 %685
    %s688 = scalar_lea.vmem [#allocation3], 40
    %689 = vst.msk [vmem:[%s688] sm:$0xff] %vm103, %v686
    %s690 = scalar_lea.vmem [#allocation2], 48
    %v691 = vld [vmem:[%s690] sm:$0xff]
    %v692 = vpack.c.bf16 %v683, %v683
    %694 = vrot.lane.b32.xlu0 %v692, 32
    %v695 = vpop.permute.xlu0 %694
    %v697 = vsel %vm103, %v695, 0
    %699 = vmatprep.subr.bf16.mxu0 0
    %700 = vmatpush1.bf16.msra.mxu0 %v213
    %701 = vmatprep.subr.bf16.mxu0 0
    %702 = vmatpush1.bf16.msra.mxu0 %v214
    %703 = vmatprep.subr.bf16.mxu0 0
    %704 = vmatpush1.bf16.msra.mxu0 0
    %705 = vmatprep.subr.bf16.mxu0 0
    %706 = vmatpush1.bf16.msra.mxu0 0
    %707 = vmatprep.subr.bf16.mxu0 0
    %708 = vmatpush1.bf16.msra.mxu0 0
    %709 = vmatprep.subr.bf16.mxu0 0
    %710 = vmatpush1.bf16.msra.mxu0 0
    %711 = vmatprep.subr.bf16.mxu0 0
    %712 = vmatpush1.bf16.msra.mxu0 0
    %713 = vmatprep.subr.bf16.mxu0 0
    %714 = vmatpush1.bf16.msra.mxu0 0
    %715 = vmatprep.subr.bf16.mxu0 0
    %716 = vmatpush1.bf16.msra.mxu0 0
    %717 = vmatprep.subr.bf16.mxu0 0
    %718 = vmatpush1.bf16.msra.mxu0 0
    %719 = vmatprep.subr.bf16.mxu0 0
    %720 = vmatpush1.bf16.msra.mxu0 0
    %721 = vmatprep.subr.bf16.mxu0 0
    %722 = vmatpush1.bf16.msra.mxu0 0
    %723 = vmatprep.subr.bf16.mxu0 0
    %724 = vmatpush1.bf16.msra.mxu0 0
    %725 = vmatprep.subr.bf16.mxu0 0
    %726 = vmatpush1.bf16.msra.mxu0 0
    %727 = vmatprep.subr.bf16.mxu0 0
    %728 = vmatpush1.bf16.msra.mxu0 0
    %729 = vmatprep.subr.bf16.mxu0 0
    %730 = vmatpush1.bf16.msra.mxu0 0
    %731 = vmatprep.mubr.bf16.mxu0 0
    %732 = vmatmul.mubr.bf16.gmra.mrb[0].mxu0 %v697
    %v733 = vpop.f32.mrb[0].mxu0
    %v734 = vadd.f32 0.0, %v733
    %v735 = vpop.f32.mrb[0].mxu0
    %v736 = vpop.f32.mrb[0].mxu0
    %v737 = vpop.f32.mrb[0].mxu0
    %738 = vdwg.mxu0
    %v739 = vadd.f32 %v691, %v734
    %v740 = vxor.u32 %v739, 2147483648
    %v741 = vmul.f32 %v740, 1.442695
    %v742 = vpow.pop %v741
    %v743 = vadd.f32 %v742, 1.0
    %v744 = vrcp.pop %v743
    %v745 = vmul.f32 1.0, %v744
    %v746 = vtanh.pop %v739
    %v747 = vmul.f32 %v745, %v677
    %749 = vrot.lane.b32.xlu0 %v746, 64
    %v750 = vpop.permute.xlu0 %749
    %v752 = vmul.f32 %v745, %v750
    %754 = vrot.lane.b32.xlu0 %v752, 32
    %v755 = vpop.permute.xlu0 %754
    %v757 = vadd.f32 %v747, %v755
    %v758 = vtanh.pop %v757
    %760 = vrot.lane.b32.xlu0 %v758, 64
    %v761 = vpop.permute.xlu0 %760
    %v763 = vmul.f32 %v745, %v761
    %765 = vrot.lane.b32.xlu0 %v763, 32
    %v766 = vpop.permute.xlu0 %765
    %s768 = scalar_lea.vmem [#allocation3], 48
    %769 = vst.msk [vmem:[%s768] sm:$0xff] %vm103, %v766
    %s770 = scalar_lea.vmem [#allocation2], 56
    %v771 = vld [vmem:[%s770] sm:$0xff]
    %v772 = vpack.c.bf16 %v763, %v763
    %774 = vrot.lane.b32.xlu0 %v772, 32
    %v775 = vpop.permute.xlu0 %774
    %v777 = vsel %vm103, %v775, 0
    %779 = vmatprep.subr.bf16.mxu0 0
    %780 = vmatpush1.bf16.msra.mxu0 %v213
    %781 = vmatprep.subr.bf16.mxu0 0
    %782 = vmatpush1.bf16.msra.mxu0 %v214
    %783 = vmatprep.subr.bf16.mxu0 0
    %784 = vmatpush1.bf16.msra.mxu0 0
    %785 = vmatprep.subr.bf16.mxu0 0
    %786 = vmatpush1.bf16.msra.mxu0 0
    %787 = vmatprep.subr.bf16.mxu0 0
    %788 = vmatpush1.bf16.msra.mxu0 0
    %789 = vmatprep.subr.bf16.mxu0 0
    %790 = vmatpush1.bf16.msra.mxu0 0
    %791 = vmatprep.subr.bf16.mxu0 0
    %792 = vmatpush1.bf16.msra.mxu0 0
    %793 = vmatprep.subr.bf16.mxu0 0
    %794 = vmatpush1.bf16.msra.mxu0 0
    %795 = vmatprep.subr.bf16.mxu0 0
    %796 = vmatpush1.bf16.msra.mxu0 0
    %797 = vmatprep.subr.bf16.mxu0 0
    %798 = vmatpush1.bf16.msra.mxu0 0
    %799 = vmatprep.subr.bf16.mxu0 0
    %800 = vmatpush1.bf16.msra.mxu0 0
    %801 = vmatprep.subr.bf16.mxu0 0
    %802 = vmatpush1.bf16.msra.mxu0 0
    %803 = vmatprep.subr.bf16.mxu0 0
    %804 = vmatpush1.bf16.msra.mxu0 0
    %805 = vmatprep.subr.bf16.mxu0 0
    %806 = vmatpush1.bf16.msra.mxu0 0
    %807 = vmatprep.subr.bf16.mxu0 0
    %808 = vmatpush1.bf16.msra.mxu0 0
    %809 = vmatprep.subr.bf16.mxu0 0
    %810 = vmatpush1.bf16.msra.mxu0 0
    %811 = vmatprep.mubr.bf16.mxu0 0
    %812 = vmatmul.mubr.bf16.gmra.mrb[0].mxu0 %v777
    %v813 = vpop.f32.mrb[0].mxu0
    %v814 = vadd.f32 0.0, %v813
    %v815 = vpop.f32.mrb[0].mxu0
    %v816 = vpop.f32.mrb[0].mxu0
    %v817 = vpop.f32.mrb[0].mxu0
    %818 = vdwg.mxu0
    %v819 = vadd.f32 %v771, %v814
    %v820 = vxor.u32 %v819, 2147483648
    %v821 = vmul.f32 %v820, 1.442695
    %v822 = vpow.pop %v821
    %v823 = vadd.f32 %v822, 1.0
    %v824 = vrcp.pop %v823
    %v825 = vmul.f32 1.0, %v824
    %v826 = vtanh.pop %v819
    %v827 = vmul.f32 %v825, %v757
    %829 = vrot.lane.b32.xlu0 %v826, 64
    %v830 = vpop.permute.xlu0 %829
    %v832 = vmul.f32 %v825, %v830
    %834 = vrot.lane.b32.xlu0 %v832, 32
    %v835 = vpop.permute.xlu0 %834
    %v837 = vadd.f32 %v827, %v835
    %v838 = vtanh.pop %v837
    %840 = vrot.lane.b32.xlu0 %v838, 64
    %v841 = vpop.permute.xlu0 %840
    %v843 = vmul.f32 %v825, %v841
    %845 = vrot.lane.b32.xlu0 %v843, 32
    %v846 = vpop.permute.xlu0 %845
    %s848 = scalar_lea.vmem [#allocation3], 56
    %849 = vst.msk [vmem:[%s848] sm:$0xff] %vm103, %v846
    %s850 = scalar_lea.vmem [#allocation2], 64
    %v851 = vld [vmem:[%s850] sm:$0xff]
    %v852 = vpack.c.bf16 %v843, %v843
    %854 = vrot.lane.b32.xlu0 %v852, 32
    %v855 = vpop.permute.xlu0 %854
    %v857 = vsel %vm103, %v855, 0
    %859 = vmatprep.subr.bf16.mxu0 0
    %860 = vmatpush1.bf16.msra.mxu0 %v213
    %861 = vmatprep.subr.bf16.mxu0 0
    %862 = vmatpush1.bf16.msra.mxu0 %v214
    %863 = vmatprep.subr.bf16.mxu0 0
    %864 = vmatpush1.bf16.msra.mxu0 0
    %865 = vmatprep.subr.bf16.mxu0 0
    %866 = vmatpush1.bf16.msra.mxu0 0
    %867 = vmatprep.subr.bf16.mxu0 0
    %868 = vmatpush1.bf16.msra.mxu0 0
    %869 = vmatprep.subr.bf16.mxu0 0
    %870 = vmatpush1.bf16.msra.mxu0 0
    %871 = vmatprep.subr.bf16.mxu0 0
    %872 = vmatpush1.bf16.msra.mxu0 0
    %873 = vmatprep.subr.bf16.mxu0 0
    %874 = vmatpush1.bf16.msra.mxu0 0
    %875 = vmatprep.subr.bf16.mxu0 0
    %876 = vmatpush1.bf16.msra.mxu0 0
    %877 = vmatprep.subr.bf16.mxu0 0
    %878 = vmatpush1.bf16.msra.mxu0 0
    %879 = vmatprep.subr.bf16.mxu0 0
    %880 = vmatpush1.bf16.msra.mxu0 0
    %881 = vmatprep.subr.bf16.mxu0 0
    %882 = vmatpush1.bf16.msra.mxu0 0
    %883 = vmatprep.subr.bf16.mxu0 0
    %884 = vmatpush1.bf16.msra.mxu0 0
    %885 = vmatprep.subr.bf16.mxu0 0
    %886 = vmatpush1.bf16.msra.mxu0 0
    %887 = vmatprep.subr.bf16.mxu0 0
    %888 = vmatpush1.bf16.msra.mxu0 0
    %889 = vmatprep.subr.bf16.mxu0 0
    %890 = vmatpush1.bf16.msra.mxu0 0
    %891 = vmatprep.mubr.bf16.mxu0 0
    %892 = vmatmul.mubr.bf16.gmra.mrb[0].mxu0 %v857
    %v893 = vpop.f32.mrb[0].mxu0
    %v894 = vadd.f32 0.0, %v893
    %v895 = vpop.f32.mrb[0].mxu0
    %v896 = vpop.f32.mrb[0].mxu0
    %v897 = vpop.f32.mrb[0].mxu0
    %898 = vdwg.mxu0
    %v899 = vadd.f32 %v851, %v894
    %v900 = vxor.u32 %v899, 2147483648
    %v901 = vmul.f32 %v900, 1.442695
    %v902 = vpow.pop %v901
    %v903 = vadd.f32 %v902, 1.0
    %v904 = vrcp.pop %v903
    %v905 = vmul.f32 1.0, %v904
    %v906 = vtanh.pop %v899
    %v907 = vmul.f32 %v905, %v837
    %909 = vrot.lane.b32.xlu0 %v906, 64
    %v910 = vpop.permute.xlu0 %909
    %v912 = vmul.f32 %v905, %v910
    %914 = vrot.lane.b32.xlu0 %v912, 32
    %v915 = vpop.permute.xlu0 %914
    %v917 = vadd.f32 %v907, %v915
    %v918 = vtanh.pop %v917
    %920 = vrot.lane.b32.xlu0 %v918, 64
    %v921 = vpop.permute.xlu0 %920
    %v923 = vmul.f32 %v905, %v921
    %925 = vrot.lane.b32.xlu0 %v923, 32
    %v926 = vpop.permute.xlu0 %925
    %s928 = scalar_lea.vmem [#allocation3], 64
    %929 = vst.msk [vmem:[%s928] sm:$0xff] %vm103, %v926
    %v930 = vld [vmem:[#allocation3] sm:$0xff]
    %v931 = vld [vmem:[#allocation3 + $0x8] sm:$0xff]
    %v932 = vld [vmem:[#allocation3 + $0x10] sm:$0xff]
    %v933 = vld [vmem:[#allocation3 + $0x18] sm:$0xff]
    %v934 = vld [vmem:[#allocation3 + $0x20] sm:$0xff]
    %v935 = vld [vmem:[#allocation3 + $0x28] sm:$0xff]
    %v936 = vld [vmem:[#allocation3 + $0x30] sm:$0xff]
    %v937 = vld [vmem:[#allocation3 + $0x38] sm:$0xff]
    %v938 = vld [vmem:[#allocation3 + $0x40] sm:$0xff]
    %v939 = vpack.c.bf16 %v931, %v930
    %v940 = vpack.c.bf16 %v933, %v932
    %v941 = vpack.c.bf16 %v935, %v934
    %v942 = vpack.c.bf16 %v937, %v936
    %v943 = vpack.c.bf16 %v938, %v938
    %v944 = vld [vmem:[%s4] sm:$0xf]
    %v945 = vld [vmem:[%s4 + $0x4] sm:$0xf]
    %v946 = vld [vmem:[%s4 + $0x8] sm:$0xf]
    %v947 = vld [vmem:[%s4 + $0xc] sm:$0xf]
    %v948 = vld [vmem:[%s6] sm:$0x1]
    %v950 = vlaneseq
    %v951 = vshrl.u32 %v950, 7
    %v952 = vsub.s32 0, %v951
    %v953 = vrot.slane %v948, %v952
    %v959 = vunpack.c.l.b16 %v944
    %v960 = vunpack.c.l.b16 %v945
    %v961 = vunpack.c.l.b16 %v946
    %v962 = vunpack.c.l.b16 %v947
    %v963 = vpack.c.b16 %v960, %v959
    %v964 = vpack.c.b16 %v962, %v961
    %v968 = vsel %vm103, %v939, 0
    %v971 = vsel %vm103, %v940, 0
    %v974 = vsel %vm103, %v941, 0
    %v977 = vsel %vm103, %v942, 0
    %v980 = vsel %vm103, %v943, 0
    %982 = vmatprep.subr.bf16.mxu0 0
    %983 = vmatpush1.bf16.msra.mxu0 %v963
    %984 = vmatprep.subr.bf16.mxu0 0
    %985 = vmatpush1.bf16.msra.mxu0 %v964
    %986 = vmatprep.subr.bf16.mxu0 0
    %987 = vmatpush1.bf16.msra.mxu0 0
    %988 = vmatprep.subr.bf16.mxu0 0
    %989 = vmatpush1.bf16.msra.mxu0 0
    %990 = vmatprep.subr.bf16.mxu0 0
    %991 = vmatpush1.bf16.msra.mxu0 0
    %992 = vmatprep.subr.bf16.mxu0 0
    %993 = vmatpush1.bf16.msra.mxu0 0
    %994 = vmatprep.subr.bf16.mxu0 0
    %995 = vmatpush1.bf16.msra.mxu0 0
    %996 = vmatprep.subr.bf16.mxu0 0
    %997 = vmatpush1.bf16.msra.mxu0 0
    %998 = vmatprep.subr.bf16.mxu0 0
    %999 = vmatpush1.bf16.msra.mxu0 0
    %1000 = vmatprep.subr.bf16.mxu0 0
    %1001 = vmatpush1.bf16.msra.mxu0 0
    %1002 = vmatprep.subr.bf16.mxu0 0
    %1003 = vmatpush1.bf16.msra.mxu0 0
    %1004 = vmatprep.subr.bf16.mxu0 0
    %1005 = vmatpush1.bf16.msra.mxu0 0
    %1006 = vmatprep.subr.bf16.mxu0 0
    %1007 = vmatpush1.bf16.msra.mxu0 0
    %1008 = vmatprep.subr.bf16.mxu0 0
    %1009 = vmatpush1.bf16.msra.mxu0 0
    %1010 = vmatprep.subr.bf16.mxu0 0
    %1011 = vmatpush1.bf16.msra.mxu0 0
    %1012 = vmatprep.subr.bf16.mxu0 0
    %1013 = vmatpush1.bf16.msra.mxu0 0
    %1014 = vmatprep.mubr.bf16.mxu0 0
    %1015 = vmatmul.mubr.bf16.gmra.mrb[0].mxu0 %v968
    %v1016 = vpop.f32.mrb[0].mxu0
    %v1017 = vadd.f32 %v953, %v1016
    %v1018 = vpop.f32.mrb[0].mxu0
    %v1019 = vpop.f32.mrb[0].mxu0
    %v1020 = vadd.f32 %v953, %v1019
    %v1021 = vpop.f32.mrb[0].mxu0
    %1022 = vmatprep.mubr.bf16.mxu0 0
    %1023 = vmatmul.mubr.bf16.gmra.mrb[0].mxu0 %v971
    %v1024 = vpop.f32.mrb[0].mxu0
    %v1025 = vadd.f32 %v953, %v1024
    %v1026 = vpop.f32.mrb[0].mxu0
    %v1027 = vpop.f32.mrb[0].mxu0
    %v1028 = vadd.f32 %v953, %v1027
    %v1029 = vpop.f32.mrb[0].mxu0
    %1030 = vmatprep.mubr.bf16.mxu0 0
    %1031 = vmatmul.mubr.bf16.gmra.mrb[0].mxu0 %v974
    %v1032 = vpop.f32.mrb[0].mxu0
    %v1033 = vadd.f32 %v953, %v1032
    %v1034 = vpop.f32.mrb[0].mxu0
    %v1035 = vpop.f32.mrb[0].mxu0
    %v1036 = vadd.f32 %v953, %v1035
    %v1037 = vpop.f32.mrb[0].mxu0
    %1038 = vmatprep.mubr.bf16.mxu0 0
    %1039 = vmatmul.mubr.bf16.gmra.mrb[0].mxu0 %v977
    %v1040 = vpop.f32.mrb[0].mxu0
    %v1041 = vadd.f32 %v953, %v1040
    %v1042 = vpop.f32.mrb[0].mxu0
    %v1043 = vpop.f32.mrb[0].mxu0
    %v1044 = vadd.f32 %v953, %v1043
    %v1045 = vpop.f32.mrb[0].mxu0
    %1046 = vmatprep.mubr.bf16.mxu0 0
    %1047 = vmatmul.mubr.bf16.gmra.mrb[0].mxu0 %v980
    %v1048 = vpop.f32.mrb[0].mxu0
    %v1049 = vadd.f32 %v953, %v1048
    %v1050 = vpop.f32.mrb[0].mxu0
    %v1051 = vpop.f32.mrb[0].mxu0
    %v1052 = vpop.f32.mrb[0].mxu0
    %1053 = vdwg.mxu0
    %1054 = vst [vmem:[#allocation2] sm:$0xff] %v1017
    %1055 = vst [vmem:[#allocation2 + $0x8] sm:$0xff] %v1020
    %1056 = vst [vmem:[#allocation2 + $0x10] sm:$0xff] %v1025
    %1057 = vst [vmem:[#allocation2 + $0x18] sm:$0xff] %v1028
    %1058 = vst [vmem:[#allocation2 + $0x20] sm:$0xff] %v1033
    %1059 = vst [vmem:[#allocation2 + $0x28] sm:$0xff] %v1036
    %1060 = vst [vmem:[#allocation2 + $0x30] sm:$0xff] %v1041
    %1061 = vst [vmem:[#allocation2 + $0x38] sm:$0xff] %v1044
    %1062 = vst [vmem:[#allocation2 + $0x40] sm:$0xff] %v1049
    %v1063 = vld [vmem:[%s5] sm:$0xf]
    %v1064 = vld [vmem:[%s5 + $0x4] sm:$0xf]
    %v1065 = vld [vmem:[%s5 + $0x8] sm:$0xf]
    %v1066 = vld [vmem:[%s5 + $0xc] sm:$0xf]
    %v1067 = vld [vmem:[#allocation2] sm:$0xff]
    %v1072 = vunpack.c.l.b16 %v1063
    %v1073 = vunpack.c.l.b16 %v1064
    %v1074 = vunpack.c.l.b16 %v1065
    %v1075 = vunpack.c.l.b16 %v1066
    %v1076 = vpack.c.b16 %v1073, %v1072
    %v1077 = vpack.c.b16 %v1075, %v1074
    %1080 = vmatprep.subr.bf16.mxu0 0
    %1081 = vmatpush1.bf16.msra.mxu0 %v1076
    %1082 = vmatprep.subr.bf16.mxu0 0
    %1083 = vmatpush1.bf16.msra.mxu0 %v1077
    %1084 = vmatprep.subr.bf16.mxu0 0
    %1085 = vmatpush1.bf16.msra.mxu0 0
    %1086 = vmatprep.subr.bf16.mxu0 0
    %1087 = vmatpush1.bf16.msra.mxu0 0
    %1088 = vmatprep.subr.bf16.mxu0 0
    %1089 = vmatpush1.bf16.msra.mxu0 0
    %1090 = vmatprep.subr.bf16.mxu0 0
    %1091 = vmatpush1.bf16.msra.mxu0 0
    %1092 = vmatprep.subr.bf16.mxu0 0
    %1093 = vmatpush1.bf16.msra.mxu0 0
    %1094 = vmatprep.subr.bf16.mxu0 0
    %1095 = vmatpush1.bf16.msra.mxu0 0
    %1096 = vmatprep.subr.bf16.mxu0 0
    %1097 = vmatpush1.bf16.msra.mxu0 0
    %1098 = vmatprep.subr.bf16.mxu0 0
    %1099 = vmatpush1.bf16.msra.mxu0 0
    %1100 = vmatprep.subr.bf16.mxu0 0
    %1101 = vmatpush1.bf16.msra.mxu0 0
    %1102 = vmatprep.subr.bf16.mxu0 0
    %1103 = vmatpush1.bf16.msra.mxu0 0
    %1104 = vmatprep.subr.bf16.mxu0 0
    %1105 = vmatpush1.bf16.msra.mxu0 0
    %1106 = vmatprep.subr.bf16.mxu0 0
    %1107 = vmatpush1.bf16.msra.mxu0 0
    %1108 = vmatprep.subr.bf16.mxu0 0
    %1109 = vmatpush1.bf16.msra.mxu0 0
    %1110 = vmatprep.subr.bf16.mxu0 0
    %1111 = vmatpush1.bf16.msra.mxu0 0
    %1112 = vmatprep.mubr.bf16.mxu0 0
    %1113 = vmatmul.mubr.bf16.gmra.mrb[0].mxu0 %v218
    %v1114 = vpop.f32.mrb[0].mxu0
    %v1115 = vadd.f32 0.0, %v1114
    %v1116 = vpop.f32.mrb[0].mxu0
    %v1117 = vpop.f32.mrb[0].mxu0
    %v1118 = vpop.f32.mrb[0].mxu0
    %1119 = vdwg.mxu0
    %v1120 = vadd.f32 %v1067, %v1115
    %v1121 = vxor.u32 %v1120, 2147483648
    %v1122 = vmul.f32 %v1121, 1.442695
    %v1123 = vpow.pop %v1122
    %v1124 = vadd.f32 %v1123, 1.0
    %v1125 = vrcp.pop %v1124
    %v1126 = vmul.f32 1.0, %v1125
    %v1127 = vtanh.pop %v1120
    %v1128 = vmul.f32 %v1126, 0.0
    %1130 = vrot.lane.b32.xlu0 %v1127, 64
    %v1131 = vpop.permute.xlu0 %1130
    %v1133 = vmul.f32 %v1126, %v1131
    %1135 = vrot.lane.b32.xlu0 %v1133, 32
    %v1136 = vpop.permute.xlu0 %1135
    %v1138 = vadd.f32 %v1128, %v1136
    %v1139 = vtanh.pop %v1138
    %1141 = vrot.lane.b32.xlu0 %v1139, 64
    %v1142 = vpop.permute.xlu0 %1141
    %v1144 = vmul.f32 %v1126, %v1142
    %1146 = vrot.lane.b32.xlu0 %v1144, 32
    %v1147 = vpop.permute.xlu0 %1146
    %1149 = vst.msk [vmem:[#allocation3] sm:$0xff] %vm103, %v1147
    %v1150 = vld [vmem:[%s290] sm:$0xff]
    %v1151 = vpack.c.bf16 %v1144, %v1144
    %1153 = vrot.lane.b32.xlu0 %v1151, 32
    %v1154 = vpop.permute.xlu0 %1153
    %v1156 = vsel %vm103, %v1154, 0
    %1158 = vmatprep.subr.bf16.mxu0 0
    %1159 = vmatpush1.bf16.msra.mxu0 %v1076
    %1160 = vmatprep.subr.bf16.mxu0 0
    %1161 = vmatpush1.bf16.msra.mxu0 %v1077
    %1162 = vmatprep.subr.bf16.mxu0 0
    %1163 = vmatpush1.bf16.msra.mxu0 0
    %1164 = vmatprep.subr.bf16.mxu0 0
    %1165 = vmatpush1.bf16.msra.mxu0 0
    %1166 = vmatprep.subr.bf16.mxu0 0
    %1167 = vmatpush1.bf16.msra.mxu0 0
    %1168 = vmatprep.subr.bf16.mxu0 0
    %1169 = vmatpush1.bf16.msra.mxu0 0
    %1170 = vmatprep.subr.bf16.mxu0 0
    %1171 = vmatpush1.bf16.msra.mxu0 0
    %1172 = vmatprep.subr.bf16.mxu0 0
    %1173 = vmatpush1.bf16.msra.mxu0 0
    %1174 = vmatprep.subr.bf16.mxu0 0
    %1175 = vmatpush1.bf16.msra.mxu0 0
    %1176 = vmatprep.subr.bf16.mxu0 0
    %1177 = vmatpush1.bf16.msra.mxu0 0
    %1178 = vmatprep.subr.bf16.mxu0 0
    %1179 = vmatpush1.bf16.msra.mxu0 0
    %1180 = vmatprep.subr.bf16.mxu0 0
    %1181 = vmatpush1.bf16.msra.mxu0 0
    %1182 = vmatprep.subr.bf16.mxu0 0
    %1183 = vmatpush1.bf16.msra.mxu0 0
    %1184 = vmatprep.subr.bf16.mxu0 0
    %1185 = vmatpush1.bf16.msra.mxu0 0
    %1186 = vmatprep.subr.bf16.mxu0 0
    %1187 = vmatpush1.bf16.msra.mxu0 0
    %1188 = vmatprep.subr.bf16.mxu0 0
    %1189 = vmatpush1.bf16.msra.mxu0 0
    %1190 = vmatprep.mubr.bf16.mxu0 0
    %1191 = vmatmul.mubr.bf16.gmra.mrb[0].mxu0 %v1156
    %v1192 = vpop.f32.mrb[0].mxu0
    %v1193 = vadd.f32 0.0, %v1192
    %v1194 = vpop.f32.mrb[0].mxu0
    %v1195 = vpop.f32.mrb[0].mxu0
    %v1196 = vpop.f32.mrb[0].mxu0
    %1197 = vdwg.mxu0
    %v1198 = vadd.f32 %v1150, %v1193
    %v1199 = vxor.u32 %v1198, 2147483648
    %v1200 = vmul.f32 %v1199, 1.442695
    %v1201 = vpow.pop %v1200
    %v1202 = vadd.f32 %v1201, 1.0
    %v1203 = vrcp.pop %v1202
    %v1204 = vmul.f32 1.0, %v1203
    %v1205 = vtanh.pop %v1198
    %v1206 = vmul.f32 %v1204, %v1138
    %1208 = vrot.lane.b32.xlu0 %v1205, 64
    %v1209 = vpop.permute.xlu0 %1208
    %v1211 = vmul.f32 %v1204, %v1209
    %1213 = vrot.lane.b32.xlu0 %v1211, 32
    %v1214 = vpop.permute.xlu0 %1213
    %v1216 = vadd.f32 %v1206, %v1214
    %v1217 = vtanh.pop %v1216
    %1219 = vrot.lane.b32.xlu0 %v1217, 64
    %v1220 = vpop.permute.xlu0 %1219
    %v1222 = vmul.f32 %v1204, %v1220
    %1224 = vrot.lane.b32.xlu0 %v1222, 32
    %v1225 = vpop.permute.xlu0 %1224
    %1227 = vst.msk [vmem:[%s368] sm:$0xff] %vm103, %v1225
    %v1228 = vld [vmem:[%s370] sm:$0xff]
    %v1229 = vpack.c.bf16 %v1222, %v1222
    %1231 = vrot.lane.b32.xlu0 %v1229, 32
    %v1232 = vpop.permute.xlu0 %1231
    %v1234 = vsel %vm103, %v1232, 0
    %1236 = vmatprep.subr.bf16.mxu0 0
    %1237 = vmatpush1.bf16.msra.mxu0 %v1076
    %1238 = vmatprep.subr.bf16.mxu0 0
    %1239 = vmatpush1.bf16.msra.mxu0 %v1077
    %1240 = vmatprep.subr.bf16.mxu0 0
    %1241 = vmatpush1.bf16.msra.mxu0 0
    %1242 = vmatprep.subr.bf16.mxu0 0
    %1243 = vmatpush1.bf16.msra.mxu0 0
    %1244 = vmatprep.subr.bf16.mxu0 0
    %1245 = vmatpush1.bf16.msra.mxu0 0
    %1246 = vmatprep.subr.bf16.mxu0 0
    %1247 = vmatpush1.bf16.msra.mxu0 0
    %1248 = vmatprep.subr.bf16.mxu0 0
    %1249 = vmatpush1.bf16.msra.mxu0 0
    %1250 = vmatprep.subr.bf16.mxu0 0
    %1251 = vmatpush1.bf16.msra.mxu0 0
    %1252 = vmatprep.subr.bf16.mxu0 0
    %1253 = vmatpush1.bf16.msra.mxu0 0
    %1254 = vmatprep.subr.bf16.mxu0 0
    %1255 = vmatpush1.bf16.msra.mxu0 0
    %1256 = vmatprep.subr.bf16.mxu0 0
    %1257 = vmatpush1.bf16.msra.mxu0 0
    %1258 = vmatprep.subr.bf16.mxu0 0
    %1259 = vmatpush1.bf16.msra.mxu0 0
    %1260 = vmatprep.subr.bf16.mxu0 0
    %1261 = vmatpush1.bf16.msra.mxu0 0
    %1262 = vmatprep.subr.bf16.mxu0 0
    %1263 = vmatpush1.bf16.msra.mxu0 0
    %1264 = vmatprep.subr.bf16.mxu0 0
    %1265 = vmatpush1.bf16.msra.mxu0 0
    %1266 = vmatprep.subr.bf16.mxu0 0
    %1267 = vmatpush1.bf16.msra.mxu0 0
    %1268 = vmatprep.mubr.bf16.mxu0 0
    %1269 = vmatmul.mubr.bf16.gmra.mrb[0].mxu0 %v1234
    %v1270 = vpop.f32.mrb[0].mxu0
    %v1271 = vadd.f32 0.0, %v1270
    %v1272 = vpop.f32.mrb[0].mxu0
    %v1273 = vpop.f32.mrb[0].mxu0
    %v1274 = vpop.f32.mrb[0].mxu0
    %1275 = vdwg.mxu0
    %v1276 = vadd.f32 %v1228, %v1271
    %v1277 = vxor.u32 %v1276, 2147483648
    %v1278 = vmul.f32 %v1277, 1.442695
    %v1279 = vpow.pop %v1278
    %v1280 = vadd.f32 %v1279, 1.0
    %v1281 = vrcp.pop %v1280
    %v1282 = vmul.f32 1.0, %v1281
    %v1283 = vtanh.pop %v1276
    %v1284 = vmul.f32 %v1282, %v1216
    %1286 = vrot.lane.b32.xlu0 %v1283, 64
    %v1287 = vpop.permute.xlu0 %1286
    %v1289 = vmul.f32 %v1282, %v1287
    %1291 = vrot.lane.b32.xlu0 %v1289, 32
    %v1292 = vpop.permute.xlu0 %1291
    %v1294 = vadd.f32 %v1284, %v1292
    %v1295 = vtanh.pop %v1294
    %1297 = vrot.lane.b32.xlu0 %v1295, 64
    %v1298 = vpop.permute.xlu0 %1297
    %v1300 = vmul.f32 %v1282, %v1298
    %1302 = vrot.lane.b32.xlu0 %v1300, 32
    %v1303 = vpop.permute.xlu0 %1302
    %1305 = vst.msk [vmem:[%s448] sm:$0xff] %vm103, %v1303
    %v1306 = vld [vmem:[%s450] sm:$0xff]
    %v1307 = vpack.c.bf16 %v1300, %v1300
    %1309 = vrot.lane.b32.xlu0 %v1307, 32
    %v1310 = vpop.permute.xlu0 %1309
    %v1312 = vsel %vm103, %v1310, 0
    %1314 = vmatprep.subr.bf16.mxu0 0
    %1315 = vmatpush1.bf16.msra.mxu0 %v1076
    %1316 = vmatprep.subr.bf16.mxu0 0
    %1317 = vmatpush1.bf16.msra.mxu0 %v1077
    %1318 = vmatprep.subr.bf16.mxu0 0
    %1319 = vmatpush1.bf16.msra.mxu0 0
    %1320 = vmatprep.subr.bf16.mxu0 0
    %1321 = vmatpush1.bf16.msra.mxu0 0
    %1322 = vmatprep.subr.bf16.mxu0 0
    %1323 = vmatpush1.bf16.msra.mxu0 0
    %1324 = vmatprep.subr.bf16.mxu0 0
    %1325 = vmatpush1.bf16.msra.mxu0 0
    %1326 = vmatprep.subr.bf16.mxu0 0
    %1327 = vmatpush1.bf16.msra.mxu0 0
    %1328 = vmatprep.subr.bf16.mxu0 0
    %1329 = vmatpush1.bf16.msra.mxu0 0
    %1330 = vmatprep.subr.bf16.mxu0 0
    %1331 = vmatpush1.bf16.msra.mxu0 0
    %1332 = vmatprep.subr.bf16.mxu0 0
    %1333 = vmatpush1.bf16.msra.mxu0 0
    %1334 = vmatprep.subr.bf16.mxu0 0
    %1335 = vmatpush1.bf16.msra.mxu0 0
    %1336 = vmatprep.subr.bf16.mxu0 0
    %1337 = vmatpush1.bf16.msra.mxu0 0
    %1338 = vmatprep.subr.bf16.mxu0 0
    %1339 = vmatpush1.bf16.msra.mxu0 0
    %1340 = vmatprep.subr.bf16.mxu0 0
    %1341 = vmatpush1.bf16.msra.mxu0 0
    %1342 = vmatprep.subr.bf16.mxu0 0
    %1343 = vmatpush1.bf16.msra.mxu0 0
    %1344 = vmatprep.subr.bf16.mxu0 0
    %1345 = vmatpush1.bf16.msra.mxu0 0
    %1346 = vmatprep.mubr.bf16.mxu0 0
    %1347 = vmatmul.mubr.bf16.gmra.mrb[0].mxu0 %v1312
    %v1348 = vpop.f32.mrb[0].mxu0
    %v1349 = vadd.f32 0.0, %v1348
    %v1350 = vpop.f32.mrb[0].mxu0
    %v1351 = vpop.f32.mrb[0].mxu0
    %v1352 = vpop.f32.mrb[0].mxu0
    %1353 = vdwg.mxu0
    %v1354 = vadd.f32 %v1306, %v1349
    %v1355 = vxor.u32 %v1354, 2147483648
    %v1356 = vmul.f32 %v1355, 1.442695
    %v1357 = vpow.pop %v1356
    %v1358 = vadd.f32 %v1357, 1.0
    %v1359 = vrcp.pop %v1358
    %v1360 = vmul.f32 1.0, %v1359
    %v1361 = vtanh.pop %v1354
    %v1362 = vmul.f32 %v1360, %v1294
    %1364 = vrot.lane.b32.xlu0 %v1361, 64
    %v1365 = vpop.permute.xlu0 %1364
    %v1367 = vmul.f32 %v1360, %v1365
    %1369 = vrot.lane.b32.xlu0 %v1367, 32
    %v1370 = vpop.permute.xlu0 %1369
    %v1372 = vadd.f32 %v1362, %v1370
    %v1373 = vtanh.pop %v1372
    %1375 = vrot.lane.b32.xlu0 %v1373, 64
    %v1376 = vpop.permute.xlu0 %1375
    %v1378 = vmul.f32 %v1360, %v1376
    %1380 = vrot.lane.b32.xlu0 %v1378, 32
    %v1381 = vpop.permute.xlu0 %1380
    %1383 = vst.msk [vmem:[%s528] sm:$0xff] %vm103, %v1381
    %v1384 = vld [vmem:[%s530] sm:$0xff]
    %v1385 = vpack.c.bf16 %v1378, %v1378
    %1387 = vrot.lane.b32.xlu0 %v1385, 32
    %v1388 = vpop.permute.xlu0 %1387
    %v1390 = vsel %vm103, %v1388, 0
    %1392 = vmatprep.subr.bf16.mxu0 0
    %1393 = vmatpush1.bf16.msra.mxu0 %v1076
    %1394 = vmatprep.subr.bf16.mxu0 0
    %1395 = vmatpush1.bf16.msra.mxu0 %v1077
    %1396 = vmatprep.subr.bf16.mxu0 0
    %1397 = vmatpush1.bf16.msra.mxu0 0
    %1398 = vmatprep.subr.bf16.mxu0 0
    %1399 = vmatpush1.bf16.msra.mxu0 0
    %1400 = vmatprep.subr.bf16.mxu0 0
    %1401 = vmatpush1.bf16.msra.mxu0 0
    %1402 = vmatprep.subr.bf16.mxu0 0
    %1403 = vmatpush1.bf16.msra.mxu0 0
    %1404 = vmatprep.subr.bf16.mxu0 0
    %1405 = vmatpush1.bf16.msra.mxu0 0
    %1406 = vmatprep.subr.bf16.mxu0 0
    %1407 = vmatpush1.bf16.msra.mxu0 0
    %1408 = vmatprep.subr.bf16.mxu0 0
    %1409 = vmatpush1.bf16.msra.mxu0 0
    %1410 = vmatprep.subr.bf16.mxu0 0
    %1411 = vmatpush1.bf16.msra.mxu0 0
    %1412 = vmatprep.subr.bf16.mxu0 0
    %1413 = vmatpush1.bf16.msra.mxu0 0
    %1414 = vmatprep.subr.bf16.mxu0 0
    %1415 = vmatpush1.bf16.msra.mxu0 0
    %1416 = vmatprep.subr.bf16.mxu0 0
    %1417 = vmatpush1.bf16.msra.mxu0 0
    %1418 = vmatprep.subr.bf16.mxu0 0
    %1419 = vmatpush1.bf16.msra.mxu0 0
    %1420 = vmatprep.subr.bf16.mxu0 0
    %1421 = vmatpush1.bf16.msra.mxu0 0
    %1422 = vmatprep.subr.bf16.mxu0 0
    %1423 = vmatpush1.bf16.msra.mxu0 0
    %1424 = vmatprep.mubr.bf16.mxu0 0
    %1425 = vmatmul.mubr.bf16.gmra.mrb[0].mxu0 %v1390
    %v1426 = vpop.f32.mrb[0].mxu0
    %v1427 = vadd.f32 0.0, %v1426
    %v1428 = vpop.f32.mrb[0].mxu0
    %v1429 = vpop.f32.mrb[0].mxu0
    %v1430 = vpop.f32.mrb[0].mxu0
    %1431 = vdwg.mxu0
    %v1432 = vadd.f32 %v1384, %v1427
    %v1433 = vxor.u32 %v1432, 2147483648
    %v1434 = vmul.f32 %v1433, 1.442695
    %v1435 = vpow.pop %v1434
    %v1436 = vadd.f32 %v1435, 1.0
    %v1437 = vrcp.pop %v1436
    %v1438 = vmul.f32 1.0, %v1437
    %v1439 = vtanh.pop %v1432
    %v1440 = vmul.f32 %v1438, %v1372
    %1442 = vrot.lane.b32.xlu0 %v1439, 64
    %v1443 = vpop.permute.xlu0 %1442
    %v1445 = vmul.f32 %v1438, %v1443
    %1447 = vrot.lane.b32.xlu0 %v1445, 32
    %v1448 = vpop.permute.xlu0 %1447
    %v1450 = vadd.f32 %v1440, %v1448
    %v1451 = vtanh.pop %v1450
    %1453 = vrot.lane.b32.xlu0 %v1451, 64
    %v1454 = vpop.permute.xlu0 %1453
    %v1456 = vmul.f32 %v1438, %v1454
    %1458 = vrot.lane.b32.xlu0 %v1456, 32
    %v1459 = vpop.permute.xlu0 %1458
    %1461 = vst.msk [vmem:[%s608] sm:$0xff] %vm103, %v1459
    %v1462 = vld [vmem:[%s610] sm:$0xff]
    %v1463 = vpack.c.bf16 %v1456, %v1456
    %1465 = vrot.lane.b32.xlu0 %v1463, 32
    %v1466 = vpop.permute.xlu0 %1465
    %v1468 = vsel %vm103, %v1466, 0
    %1470 = vmatprep.subr.bf16.mxu0 0
    %1471 = vmatpush1.bf16.msra.mxu0 %v1076
    %1472 = vmatprep.subr.bf16.mxu0 0
    %1473 = vmatpush1.bf16.msra.mxu0 %v1077
    %1474 = vmatprep.subr.bf16.mxu0 0
    %1475 = vmatpush1.bf16.msra.mxu0 0
    %1476 = vmatprep.subr.bf16.mxu0 0
    %1477 = vmatpush1.bf16.msra.mxu0 0
    %1478 = vmatprep.subr.bf16.mxu0 0
    %1479 = vmatpush1.bf16.msra.mxu0 0
    %1480 = vmatprep.subr.bf16.mxu0 0
    %1481 = vmatpush1.bf16.msra.mxu0 0
    %1482 = vmatprep.subr.bf16.mxu0 0
    %1483 = vmatpush1.bf16.msra.mxu0 0
    %1484 = vmatprep.subr.bf16.mxu0 0
    %1485 = vmatpush1.bf16.msra.mxu0 0
    %1486 = vmatprep.subr.bf16.mxu0 0
    %1487 = vmatpush1.bf16.msra.mxu0 0
    %1488 = vmatprep.subr.bf16.mxu0 0
    %1489 = vmatpush1.bf16.msra.mxu0 0
    %1490 = vmatprep.subr.bf16.mxu0 0
    %1491 = vmatpush1.bf16.msra.mxu0 0
    %1492 = vmatprep.subr.bf16.mxu0 0
    %1493 = vmatpush1.bf16.msra.mxu0 0
    %1494 = vmatprep.subr.bf16.mxu0 0
    %1495 = vmatpush1.bf16.msra.mxu0 0
    %1496 = vmatprep.subr.bf16.mxu0 0
    %1497 = vmatpush1.bf16.msra.mxu0 0
    %1498 = vmatprep.subr.bf16.mxu0 0
    %1499 = vmatpush1.bf16.msra.mxu0 0
    %1500 = vmatprep.subr.bf16.mxu0 0
    %1501 = vmatpush1.bf16.msra.mxu0 0
    %1502 = vmatprep.mubr.bf16.mxu0 0
    %1503 = vmatmul.mubr.bf16.gmra.mrb[0].mxu0 %v1468
    %v1504 = vpop.f32.mrb[0].mxu0
    %v1505 = vadd.f32 0.0, %v1504
    %v1506 = vpop.f32.mrb[0].mxu0
    %v1507 = vpop.f32.mrb[0].mxu0
    %v1508 = vpop.f32.mrb[0].mxu0
    %1509 = vdwg.mxu0
    %v1510 = vadd.f32 %v1462, %v1505
    %v1511 = vxor.u32 %v1510, 2147483648
    %v1512 = vmul.f32 %v1511, 1.442695
    %v1513 = vpow.pop %v1512
    %v1514 = vadd.f32 %v1513, 1.0
    %v1515 = vrcp.pop %v1514
    %v1516 = vmul.f32 1.0, %v1515
    %v1517 = vtanh.pop %v1510
    %v1518 = vmul.f32 %v1516, %v1450
    %1520 = vrot.lane.b32.xlu0 %v1517, 64
    %v1521 = vpop.permute.xlu0 %1520
    %v1523 = vmul.f32 %v1516, %v1521
    %1525 = vrot.lane.b32.xlu0 %v1523, 32
    %v1526 = vpop.permute.xlu0 %1525
    %v1528 = vadd.f32 %v1518, %v1526
    %v1529 = vtanh.pop %v1528
    %1531 = vrot.lane.b32.xlu0 %v1529, 64
    %v1532 = vpop.permute.xlu0 %1531
    %v1534 = vmul.f32 %v1516, %v1532
    %1536 = vrot.lane.b32.xlu0 %v1534, 32
    %v1537 = vpop.permute.xlu0 %1536
    %1539 = vst.msk [vmem:[%s688] sm:$0xff] %vm103, %v1537
    %v1540 = vld [vmem:[%s690] sm:$0xff]
    %v1541 = vpack.c.bf16 %v1534, %v1534
    %1543 = vrot.lane.b32.xlu0 %v1541, 32
    %v1544 = vpop.permute.xlu0 %1543
    %v1546 = vsel %vm103, %v1544, 0
    %1548 = vmatprep.subr.bf16.mxu0 0
    %1549 = vmatpush1.bf16.msra.mxu0 %v1076
    %1550 = vmatprep.subr.bf16.mxu0 0
    %1551 = vmatpush1.bf16.msra.mxu0 %v1077
    %1552 = vmatprep.subr.bf16.mxu0 0
    %1553 = vmatpush1.bf16.msra.mxu0 0
    %1554 = vmatprep.subr.bf16.mxu0 0
    %1555 = vmatpush1.bf16.msra.mxu0 0
    %1556 = vmatprep.subr.bf16.mxu0 0
    %1557 = vmatpush1.bf16.msra.mxu0 0
    %1558 = vmatprep.subr.bf16.mxu0 0
    %1559 = vmatpush1.bf16.msra.mxu0 0
    %1560 = vmatprep.subr.bf16.mxu0 0
    %1561 = vmatpush1.bf16.msra.mxu0 0
    %1562 = vmatprep.subr.bf16.mxu0 0
    %1563 = vmatpush1.bf16.msra.mxu0 0
    %1564 = vmatprep.subr.bf16.mxu0 0
    %1565 = vmatpush1.bf16.msra.mxu0 0
    %1566 = vmatprep.subr.bf16.mxu0 0
    %1567 = vmatpush1.bf16.msra.mxu0 0
    %1568 = vmatprep.subr.bf16.mxu0 0
    %1569 = vmatpush1.bf16.msra.mxu0 0
    %1570 = vmatprep.subr.bf16.mxu0 0
    %1571 = vmatpush1.bf16.msra.mxu0 0
    %1572 = vmatprep.subr.bf16.mxu0 0
    %1573 = vmatpush1.bf16.msra.mxu0 0
    %1574 = vmatprep.subr.bf16.mxu0 0
    %1575 = vmatpush1.bf16.msra.mxu0 0
    %1576 = vmatprep.subr.bf16.mxu0 0
    %1577 = vmatpush1.bf16.msra.mxu0 0
    %1578 = vmatprep.subr.bf16.mxu0 0
    %1579 = vmatpush1.bf16.msra.mxu0 0
    %1580 = vmatprep.mubr.bf16.mxu0 0
    %1581 = vmatmul.mubr.bf16.gmra.mrb[0].mxu0 %v1546
    %v1582 = vpop.f32.mrb[0].mxu0
    %v1583 = vadd.f32 0.0, %v1582
    %v1584 = vpop.f32.mrb[0].mxu0
    %v1585 = vpop.f32.mrb[0].mxu0
    %v1586 = vpop.f32.mrb[0].mxu0
    %1587 = vdwg.mxu0
    %v1588 = vadd.f32 %v1540, %v1583
    %v1589 = vxor.u32 %v1588, 2147483648
    %v1590 = vmul.f32 %v1589, 1.442695
    %v1591 = vpow.pop %v1590
    %v1592 = vadd.f32 %v1591, 1.0
    %v1593 = vrcp.pop %v1592
    %v1594 = vmul.f32 1.0, %v1593
    %v1595 = vtanh.pop %v1588
    %v1596 = vmul.f32 %v1594, %v1528
    %1598 = vrot.lane.b32.xlu0 %v1595, 64
    %v1599 = vpop.permute.xlu0 %1598
    %v1601 = vmul.f32 %v1594, %v1599
    %1603 = vrot.lane.b32.xlu0 %v1601, 32
    %v1604 = vpop.permute.xlu0 %1603
    %v1606 = vadd.f32 %v1596, %v1604
    %v1607 = vtanh.pop %v1606
    %1609 = vrot.lane.b32.xlu0 %v1607, 64
    %v1610 = vpop.permute.xlu0 %1609
    %v1612 = vmul.f32 %v1594, %v1610
    %1614 = vrot.lane.b32.xlu0 %v1612, 32
    %v1615 = vpop.permute.xlu0 %1614
    %1617 = vst.msk [vmem:[%s768] sm:$0xff] %vm103, %v1615
    %v1618 = vld [vmem:[%s770] sm:$0xff]
    %v1619 = vpack.c.bf16 %v1612, %v1612
    %1621 = vrot.lane.b32.xlu0 %v1619, 32
    %v1622 = vpop.permute.xlu0 %1621
    %v1624 = vsel %vm103, %v1622, 0
    %1626 = vmatprep.subr.bf16.mxu0 0
    %1627 = vmatpush1.bf16.msra.mxu0 %v1076
    %1628 = vmatprep.subr.bf16.mxu0 0
    %1629 = vmatpush1.bf16.msra.mxu0 %v1077
    %1630 = vmatprep.subr.bf16.mxu0 0
    %1631 = vmatpush1.bf16.msra.mxu0 0
    %1632 = vmatprep.subr.bf16.mxu0 0
    %1633 = vmatpush1.bf16.msra.mxu0 0
    %1634 = vmatprep.subr.bf16.mxu0 0
    %1635 = vmatpush1.bf16.msra.mxu0 0
    %1636 = vmatprep.subr.bf16.mxu0 0
    %1637 = vmatpush1.bf16.msra.mxu0 0
    %1638 = vmatprep.subr.bf16.mxu0 0
    %1639 = vmatpush1.bf16.msra.mxu0 0
    %1640 = vmatprep.subr.bf16.mxu0 0
    %1641 = vmatpush1.bf16.msra.mxu0 0
    %1642 = vmatprep.subr.bf16.mxu0 0
    %1643 = vmatpush1.bf16.msra.mxu0 0
    %1644 = vmatprep.subr.bf16.mxu0 0
    %1645 = vmatpush1.bf16.msra.mxu0 0
    %1646 = vmatprep.subr.bf16.mxu0 0
    %1647 = vmatpush1.bf16.msra.mxu0 0
    %1648 = vmatprep.subr.bf16.mxu0 0
    %1649 = vmatpush1.bf16.msra.mxu0 0
    %1650 = vmatprep.subr.bf16.mxu0 0
    %1651 = vmatpush1.bf16.msra.mxu0 0
    %1652 = vmatprep.subr.bf16.mxu0 0
    %1653 = vmatpush1.bf16.msra.mxu0 0
    %1654 = vmatprep.subr.bf16.mxu0 0
    %1655 = vmatpush1.bf16.msra.mxu0 0
    %1656 = vmatprep.subr.bf16.mxu0 0
    %1657 = vmatpush1.bf16.msra.mxu0 0
    %1658 = vmatprep.mubr.bf16.mxu0 0
    %1659 = vmatmul.mubr.bf16.gmra.mrb[0].mxu0 %v1624
    %v1660 = vpop.f32.mrb[0].mxu0
    %v1661 = vadd.f32 0.0, %v1660
    %v1662 = vpop.f32.mrb[0].mxu0
    %v1663 = vpop.f32.mrb[0].mxu0
    %v1664 = vpop.f32.mrb[0].mxu0
    %1665 = vdwg.mxu0
    %v1666 = vadd.f32 %v1618, %v1661
    %v1667 = vxor.u32 %v1666, 2147483648
    %v1668 = vmul.f32 %v1667, 1.442695
    %v1669 = vpow.pop %v1668
    %v1670 = vadd.f32 %v1669, 1.0
    %v1671 = vrcp.pop %v1670
    %v1672 = vmul.f32 1.0, %v1671
    %v1673 = vtanh.pop %v1666
    %v1674 = vmul.f32 %v1672, %v1606
    %1676 = vrot.lane.b32.xlu0 %v1673, 64
    %v1677 = vpop.permute.xlu0 %1676
    %v1679 = vmul.f32 %v1672, %v1677
    %1681 = vrot.lane.b32.xlu0 %v1679, 32
    %v1682 = vpop.permute.xlu0 %1681
    %v1684 = vadd.f32 %v1674, %v1682
    %v1685 = vtanh.pop %v1684
    %1687 = vrot.lane.b32.xlu0 %v1685, 64
    %v1688 = vpop.permute.xlu0 %1687
    %v1690 = vmul.f32 %v1672, %v1688
    %1692 = vrot.lane.b32.xlu0 %v1690, 32
    %v1693 = vpop.permute.xlu0 %1692
    %1695 = vst.msk [vmem:[%s848] sm:$0xff] %vm103, %v1693
    %v1696 = vld [vmem:[%s850] sm:$0xff]
    %v1697 = vpack.c.bf16 %v1690, %v1690
    %1699 = vrot.lane.b32.xlu0 %v1697, 32
    %v1700 = vpop.permute.xlu0 %1699
    %v1702 = vsel %vm103, %v1700, 0
    %1704 = vmatprep.subr.bf16.mxu0 0
    %1705 = vmatpush1.bf16.msra.mxu0 %v1076
    %1706 = vmatprep.subr.bf16.mxu0 0
    %1707 = vmatpush1.bf16.msra.mxu0 %v1077
    %1708 = vmatprep.subr.bf16.mxu0 0
    %1709 = vmatpush1.bf16.msra.mxu0 0
    %1710 = vmatprep.subr.bf16.mxu0 0
    %1711 = vmatpush1.bf16.msra.mxu0 0
    %1712 = vmatprep.subr.bf16.mxu0 0
    %1713 = vmatpush1.bf16.msra.mxu0 0
    %1714 = vmatprep.subr.bf16.mxu0 0
    %1715 = vmatpush1.bf16.msra.mxu0 0
    %1716 = vmatprep.subr.bf16.mxu0 0
    %1717 = vmatpush1.bf16.msra.mxu0 0
    %1718 = vmatprep.subr.bf16.mxu0 0
    %1719 = vmatpush1.bf16.msra.mxu0 0
    %1720 = vmatprep.subr.bf16.mxu0 0
    %1721 = vmatpush1.bf16.msra.mxu0 0
    %1722 = vmatprep.subr.bf16.mxu0 0
    %1723 = vmatpush1.bf16.msra.mxu0 0
    %1724 = vmatprep.subr.bf16.mxu0 0
    %1725 = vmatpush1.bf16.msra.mxu0 0
    %1726 = vmatprep.subr.bf16.mxu0 0
    %1727 = vmatpush1.bf16.msra.mxu0 0
    %1728 = vmatprep.subr.bf16.mxu0 0
    %1729 = vmatpush1.bf16.msra.mxu0 0
    %1730 = vmatprep.subr.bf16.mxu0 0
    %1731 = vmatpush1.bf16.msra.mxu0 0
    %1732 = vmatprep.subr.bf16.mxu0 0
    %1733 = vmatpush1.bf16.msra.mxu0 0
    %1734 = vmatprep.subr.bf16.mxu0 0
    %1735 = vmatpush1.bf16.msra.mxu0 0
    %1736 = vmatprep.mubr.bf16.mxu0 0
    %1737 = vmatmul.mubr.bf16.gmra.mrb[0].mxu0 %v1702
    %v1738 = vpop.f32.mrb[0].mxu0
    %v1739 = vadd.f32 0.0, %v1738
    %v1740 = vpop.f32.mrb[0].mxu0
    %v1741 = vpop.f32.mrb[0].mxu0
    %v1742 = vpop.f32.mrb[0].mxu0
    %1743 = vdwg.mxu0
    %v1744 = vadd.f32 %v1696, %v1739
    %v1745 = vxor.u32 %v1744, 2147483648
    %v1746 = vmul.f32 %v1745, 1.442695
    %v1747 = vpow.pop %v1746
    %v1748 = vadd.f32 %v1747, 1.0
    %v1749 = vrcp.pop %v1748
    %v1750 = vmul.f32 1.0, %v1749
    %v1751 = vtanh.pop %v1744
    %v1752 = vmul.f32 %v1750, %v1684
    %1754 = vrot.lane.b32.xlu0 %v1751, 64
    %v1755 = vpop.permute.xlu0 %1754
    %v1757 = vmul.f32 %v1750, %v1755
    %1759 = vrot.lane.b32.xlu0 %v1757, 32
    %v1760 = vpop.permute.xlu0 %1759
    %v1762 = vadd.f32 %v1752, %v1760
    %v1763 = vtanh.pop %v1762
    %1765 = vrot.lane.b32.xlu0 %v1763, 64
    %v1766 = vpop.permute.xlu0 %1765
    %v1768 = vmul.f32 %v1750, %v1766
    %1770 = vrot.lane.b32.xlu0 %v1768, 32
    %v1771 = vpop.permute.xlu0 %1770
    %1773 = vst.msk [vmem:[%s928] sm:$0xff] %vm103, %v1771
    %1774 = vst.msk [vmem:[#allocation4] sm:$0xff] %vm103, 0.0
    %1775 = vst.msk [vmem:[#allocation4 + $0x8] sm:$0xff] %vm103, 0.0
    %v1776 = vld [vmem:[#allocation3] sm:$0x3]
    %vm1777 = vcmask 254976
    %1778 = vst.msk [vmem:[#allocation4] sm:$0x3] %vm1777, %v1776
    %v1779 = vld [vmem:[#allocation3 + $0x8] sm:$0x3]
    %1780 = vst.msk [vmem:[#allocation4 + $0x2] sm:$0x3] %vm1777, %v1779
    %v1781 = vld [vmem:[#allocation3 + $0x10] sm:$0x3]
    %1782 = vst.msk [vmem:[#allocation4 + $0x4] sm:$0x3] %vm1777, %v1781
    %v1783 = vld [vmem:[#allocation3 + $0x18] sm:$0x3]
    %1784 = vst.msk [vmem:[#allocation4 + $0x6] sm:$0x3] %vm1777, %v1783
    %v1785 = vld [vmem:[#allocation3 + $0x20] sm:$0x3]
    %1786 = vst.msk [vmem:[#allocation4 + $0x8] sm:$0x3] %vm1777, %v1785
    %v1787 = vld [vmem:[#allocation3 + $0x28] sm:$0x3]
    %1788 = vst.msk [vmem:[#allocation4 + $0xa] sm:$0x3] %vm1777, %v1787
    %v1789 = vld [vmem:[#allocation3 + $0x30] sm:$0x3]
    %1790 = vst.msk [vmem:[#allocation4 + $0xc] sm:$0x3] %vm1777, %v1789
    %v1791 = vld [vmem:[#allocation3 + $0x38] sm:$0x1]
    %vm1792 = vcmask 253952
    %1793 = vst.msk [vmem:[#allocation4 + $0xe] sm:$0x1] %vm1792, %v1791
    %v1794 = vld [vmem:[#allocation3 + $0x40] sm:$0x1]
    %1795 = vst.msk [vmem:[#allocation4 + $0xf] sm:$0x1] %vm1792, %v1794
    %v1796 = vld [vmem:[#allocation4] sm:$0xff]
    %v1797 = vld [vmem:[#allocation4 + $0x8] sm:$0xff]
    %v1798 = vpack.c.bf16 %v1797, %v1796
    %v1799 = vld [vmem:[#allocation5] sm:$0xf]
    %v1800 = vld [vmem:[#allocation5 + $0x4] sm:$0xf]
    %v1801 = vld [vmem:[#allocation5 + $0x8] sm:$0xf]
    %v1802 = vld [vmem:[#allocation5 + $0xc] sm:$0xf]
    %v1803 = vld [vmem:[%s8] sm:$0x1]
    %v1805 = vlaneseq
    %v1806 = vshrl.u32 %v1805, 7
    %v1807 = vsub.s32 0, %v1806
    %v1808 = vrot.slane %v1803, %v1807
    %v1814 = vunpack.c.l.b16 %v1799
    %v1815 = vunpack.c.l.b16 %v1800
    %v1816 = vunpack.c.l.b16 %v1801
    %v1817 = vunpack.c.l.b16 %v1802
    %v1818 = vpack.c.b16 %v1815, %v1814
    %v1819 = vpack.c.b16 %v1817, %v1816
    %v1823 = vsel %vm103, %v1798, 0
    %1825 = vmatprep.subr.bf16.mxu0 0
    %1826 = vmatpush1.bf16.msra.mxu0 %v1818
    %1827 = vmatprep.subr.bf16.mxu0 0
    %1828 = vmatpush1.bf16.msra.mxu0 %v1819
    %1829 = vmatprep.subr.bf16.mxu0 0
    %1830 = vmatpush1.bf16.msra.mxu0 0
    %1831 = vmatprep.subr.bf16.mxu0 0
    %1832 = vmatpush1.bf16.msra.mxu0 0
    %1833 = vmatprep.subr.bf16.mxu0 0
    %1834 = vmatpush1.bf16.msra.mxu0 0
    %1835 = vmatprep.subr.bf16.mxu0 0
    %1836 = vmatpush1.bf16.msra.mxu0 0
    %1837 = vmatprep.subr.bf16.mxu0 0
    %1838 = vmatpush1.bf16.msra.mxu0 0
    %1839 = vmatprep.subr.bf16.mxu0 0
    %1840 = vmatpush1.bf16.msra.mxu0 0
    %1841 = vmatprep.subr.bf16.mxu0 0
    %1842 = vmatpush1.bf16.msra.mxu0 0
    %1843 = vmatprep.subr.bf16.mxu0 0
    %1844 = vmatpush1.bf16.msra.mxu0 0
    %1845 = vmatprep.subr.bf16.mxu0 0
    %1846 = vmatpush1.bf16.msra.mxu0 0
    %1847 = vmatprep.subr.bf16.mxu0 0
    %1848 = vmatpush1.bf16.msra.mxu0 0
    %1849 = vmatprep.subr.bf16.mxu0 0
    %1850 = vmatpush1.bf16.msra.mxu0 0
    %1851 = vmatprep.subr.bf16.mxu0 0
    %1852 = vmatpush1.bf16.msra.mxu0 0
    %1853 = vmatprep.subr.bf16.mxu0 0
    %1854 = vmatpush1.bf16.msra.mxu0 0
    %1855 = vmatprep.subr.bf16.mxu0 0
    %1856 = vmatpush1.bf16.msra.mxu0 0
    %1857 = vmatprep.mubr.bf16.mxu0 0
    %1858 = vmatmul.mubr.bf16.gmra.mrb[0].mxu0 %v1823
    %v1859 = vpop.f32.mrb[0].mxu0
    %v1860 = vadd.f32 %v1808, %v1859
    %v1861 = vpop.f32.mrb[0].mxu0
    %v1862 = vpop.f32.mrb[0].mxu0
    %v1863 = vadd.f32 %v1808, %v1862
    %v1864 = vpop.f32.mrb[0].mxu0
    %1865 = vdwg.mxu0
    %1866 = vst [vmem:[#allocation8] sm:$0xff] %v1860
    %1867 = vst [vmem:[#allocation8 + $0x8] sm:$0xff] %v1863
    // Predicated region
    $region42: #{tpu_custom_call.1} parent=1 // pred_check
      _
    $region43: #{tpu_custom_call.1} parent=1 // pred_check_branch
      %1869 = sbr.rel (0) target = $region45
    $region44: #{tpu_custom_call.1} parent=1 // pred_region
      %s1871 = ssub.s32 256, 256
      %1872 = vsyncadd [#allocation7], %s1871
      %s1873 = sshll.u32 [#allocation8], 4
      %s1874 = int_to_ptr.vmem [resolvable:$true] %s1873
      %1879 = dma.vmem_to_hbm [thread:$0]  %s1874, 256, %s9, [#allocation7], 128, 128, 8
    $region45: #{tpu_custom_call.1} parent=1 // pred_fallthru
      _
    // Predicated region
    $region46: #{tpu_custom_call.1} parent=1 // pred_check
      _
    $region47: #{tpu_custom_call.1} parent=1 // pred_check_branch
      %1881 = sbr.rel (0) target = $region49
    $region48: #{tpu_custom_call.1} parent=1 // pred_region
      %1882 = dma.done [#allocation7], 256
    $region49: #{tpu_custom_call.1} parent=1 // pred_fallthru
      _
    %1883 = vsyncpa [#allocation6], 1
    %1884 = vsyncpa [#allocation7], 1

</llo_original>
